<compile_context>
chip_gen: v6e
topology: v6e:2x2x1
jax: 0.10.0
libtpu: 0.0.40
codegen_flags: <defaults>
</compile_context>

<pallas_src>
import functools

import jax
import jax.numpy as jnp
from jax.experimental import pallas as pl
from jax.experimental.pallas import tpu as pltpu

BN_EPS = 1e-5
LEAKY_SLOPE = 0.01  # nn.LeakyReLU default
LANE = 128


def _round_up(n, m):
    return ((n + m - 1) // m) * m


def _bn_leaky(h, gamma, beta):
    # nn.BatchNorm1d (training mode, biased batch variance), one-pass stats
    # (var = E[h^2] - mu^2; minor cancellation risk is fine at f32/eps=1e-5),
    # folded into a single FMA: scale = gamma*rsqrt(var+eps), shift = beta-mu*scale.
    mu = jnp.mean(h, axis=0, keepdims=True)
    ex2 = jnp.mean(h * h, axis=0, keepdims=True)
    var = ex2 - mu * mu
    scale = gamma * jax.lax.rsqrt(var + BN_EPS)
    shift = beta - mu * scale
    h = h * scale + shift
    return jnp.where(h >= 0, h, LEAKY_SLOPE * h)


def beta_vae_kernel(
    # inputs
    x_ref,       # [B, D]     bf16
    eps_ref,     # [B, LP]    f32   (cols >= L are exactly zero)
    ew1_ref,     # [D, H]     bf16
    ew2_ref,     # [H, 2*LP]  bf16  fused mean|log_var head (each padded to LP)
    dw1_ref,     # [LP, H]    bf16  (rows >= L are zero)
    dw2_ref,     # [H, D]     bf16
    vec_ref,     # [8, W]     f32   packed gammas / betas / biases
    # outputs
    recon_ref,   # [B, D]     f32
    ml_ref,      # [B, 2*LP]  f32   mean|log_var, lane-dense
    *,
    hidden_dim: int,
    latent_pad: int,
    input_dim: int,
):
    H, LP, D = hidden_dim, latent_pad, input_dim

    # Packed small vectors: one DMA instead of six tiny ones.
    enc_gamma = vec_ref[0:1, 0:H]
    enc_beta = vec_ref[1:2, 0:H]
    eb2 = vec_ref[2:3, 0:2 * LP]
    dec_gamma = vec_ref[3:4, 0:H]
    dec_beta = vec_ref[4:5, 0:H]
    db2 = vec_ref[5:6, 0:D]

    # ----- encoder -----
    # NOTE: a Linear bias feeding straight into training-mode BatchNorm cancels
    # exactly ((v+b) - mean(v+b) == v - mean(v)), so enc_b1 / dec_b1 are never
    # loaded.  Do NOT reuse this kernel for eval-mode (running-stat) BN.
    h = jnp.dot(x_ref[...], ew1_ref[...], preferred_element_type=jnp.float32)
    h = _bn_leaky(h, enc_gamma, enc_beta)

    # Single fused [H, 2*LP] latent head: fills the 256-wide MXU on v6e/v7x;
    # the mean / log_var split at column LP=128 is lane-tile aligned (free).
    stats = jnp.dot(h.astype(jnp.bfloat16), ew2_ref[...],
                    preferred_element_type=jnp.float32) + eb2
    mean_p = stats[:, :LP]
    lv_p = stats[:, LP:]

    # ----- reparameterize -----
    # Padded cols: mean=log_var=0 and eps=0, and dw1's padded rows are zero,
    # so they never leak into recon.
    z = mean_p + eps_ref[...] * jnp.exp(0.5 * lv_p)

    # ----- decoder -----
    g = jnp.dot(z.astype(jnp.bfloat16), dw1_ref[...],
                preferred_element_type=jnp.float32)
    g = _bn_leaky(g, dec_gamma, dec_beta)
    recon = jnp.dot(g.astype(jnp.bfloat16), dw2_ref[...],
                    preferred_element_type=jnp.float32) + db2

    # TODO(synk): emit recon in bf16 if the downstream loss tolerates it
    # (halves the largest output's DMA bytes on this DMA-bound kernel).
    recon_ref[...] = recon
    ml_ref[...] = stats


def pack_params(params, latent_dim):
    """One-time repack of module parameters into kernel-ready arrays.

    Call once at init / after each parameter update, NOT per forward: at these
    sizes the kernel is launch/DMA-bound and re-running the pads/concats/casts
    every call would cost as much as the kernel itself.
    """
    bf16, f32 = jnp.bfloat16, jnp.float32
    L = latent_dim
    H = params["enc_gamma"].shape[-1]
    D = params["enc_w1"].shape[0]
    LP = _round_up(max(L, LANE), LANE)   # latent width padded to a lane tile
    W = max(H, 2 * LP, D)                # packed small-vector width

    w2 = params["enc_w2"]                     # [H, 2L]
    b2 = params["enc_b2"].reshape(1, -1)      # [1, 2L]
    pad_c = lambda a: jnp.pad(a, ((0, 0), (0, LP - L)))
    ew2 = jnp.concatenate([pad_c(w2[:, :L]), pad_c(w2[:, L:])], axis=1).astype(bf16)
    eb2 = jnp.concatenate([pad_c(b2[:, :L]), pad_c(b2[:, L:])], axis=1).astype(f32)

    def row(v):
        v = v.reshape(1, -1).astype(f32)
        return jnp.pad(v, ((0, 0), (0, W - v.shape[1])))

    vecs = jnp.concatenate(
        [
            row(params["enc_gamma"]), row(params["enc_beta"]),
            row(eb2),
            row(params["dec_gamma"]), row(params["dec_beta"]),
            row(params["dec_b2"]),
            jnp.zeros((2, W), f32),            # pad to 8 sublanes
        ],
        axis=0,
    )

    return dict(
        ew1=params["enc_w1"].astype(bf16),                               # [D, H]
        ew2=ew2,                                                         # [H, 2LP]
        dw1=jnp.pad(params["dec_w1"], ((0, LP - L), (0, 0))).astype(bf16),  # [LP, H]
        dw2=params["dec_w2"].astype(bf16),                               # [H, D]
        vecs=vecs,                                                       # [8, W]
    )


@functools.partial(jax.jit, static_argnames=("latent_dim",))
def beta_vae_forward(x, eps_noise, packed, *, latent_dim):
    B, D = x.shape
    H = packed["ew1"].shape[1]
    LP = packed["dw1"].shape[0]
    L = latent_dim
    f32 = jnp.float32

    # Only per-call data prep: bf16 x (halves the largest input's DMA bytes)
    # and zero-padded eps (invariant: padded cols must stay exactly zero).
    x_bf = x.astype(jnp.bfloat16)
    eps_p = jnp.pad(eps_noise.astype(f32), ((0, 0), (0, LP - L)))

    inputs = (x_bf, eps_p, packed["ew1"], packed["ew2"],
              packed["dw1"], packed["dw2"], packed["vecs"])

    vmem = pl.BlockSpec(memory_space=pltpu.MemorySpace.VMEM)
    out_shape = (
        jax.ShapeDtypeStruct((B, D), f32),       # reconstruction
        jax.ShapeDtypeStruct((B, 2 * LP), f32),  # mean|log_var, lane-dense
    )

    in_bytes = sum(int(a.size) * a.dtype.itemsize for a in inputs)
    out_bytes = B * D * 4 + B * 2 * LP * 4
    cost = pl.CostEstimate(
        flops=2 * B * (D * H + H * 2 * LP + LP * H + H * D),
        transcendentals=B * LP + 2 * H,
        bytes_accessed=in_bytes + out_bytes,
    )

    kernel = functools.partial(
        beta_vae_kernel, hidden_dim=H, latent_pad=LP, input_dim=D)

    # TODO(synk): for large input_dim/intermediate_dim, add a 'parallel' grid
    # over output feature columns of ew1/dw2 plus K-tiling with a pl.when
    # accumulator (keep the full batch per block -- BN needs all rows) instead
    # of raising vmem_limit_bytes; required on v7x (64 MiB physical VMEM).
    # TODO(synk): to use v7x's second TensorCore, batch independent forwards
    # into a leading 'parallel' grid axis of 128-row blocks (do not split one
    # BN batch across cores).
    recon, ml = pl.pallas_call(
        kernel,
        out_shape=out_shape,
        in_specs=[vmem] * len(inputs),
        out_specs=(vmem, vmem),
        compiler_params=pltpu.CompilerParams(vmem_limit_bytes=32 * 1024 * 1024),
        cost_estimate=cost,
    )(*inputs)

    # Strip lane padding outside the kernel (aligned XLA slices, cheap).
    return recon, ml[:, :L], ml[:, LP:LP + L]


def init_params(key, input_dim, intermediate_dim, latent_dim):
    """Deterministic synthetic initialization (same shapes as the torch module)."""
    ks = jax.random.split(key, 4)

    def lin(k, fan_in, fan_out):
        bound = 1.0 / jnp.sqrt(fan_in)
        kw, kb = jax.random.split(k)
        w = jax.random.uniform(kw, (fan_in, fan_out), jnp.float32, -bound, bound)
        b = jax.random.uniform(kb, (1, fan_out), jnp.float32, -bound, bound)
        return w, b

    enc_w1, enc_b1 = lin(ks[0], input_dim, intermediate_dim)
    enc_w2, enc_b2 = lin(ks[1], intermediate_dim, 2 * latent_dim)
    dec_w1, dec_b1 = lin(ks[2], latent_dim, intermediate_dim)
    dec_w2, dec_b2 = lin(ks[3], intermediate_dim, input_dim)

    return dict(
        enc_w1=enc_w1, enc_b1=enc_b1,
        enc_gamma=jnp.ones((1, intermediate_dim), jnp.float32),
        enc_beta=jnp.zeros((1, intermediate_dim), jnp.float32),
        enc_w2=enc_w2, enc_b2=enc_b2,
        dec_w1=dec_w1, dec_b1=dec_b1,
        dec_gamma=jnp.ones((1, intermediate_dim), jnp.float32),
        dec_beta=jnp.zeros((1, intermediate_dim), jnp.float32),
        dec_w2=dec_w2, dec_b2=dec_b2,
    )


def reference_forward(x, eps_noise, params, latent_dim):
    """Pure-JAX reference (same bf16-matmul / f32-accumulate precision)."""
    bf16, f32 = jnp.bfloat16, jnp.float32

    def lin(a, w, b):
        return jnp.dot(a.astype(bf16), w.astype(bf16),
                       preferred_element_type=f32) + b

    def bn(h, g, b):
        mu = h.mean(0, keepdims=True)
        var = ((h - mu) ** 2).mean(0, keepdims=True)
        return (h - mu) / jnp.sqrt(var + BN_EPS) * g + b

    def lrelu(h):
        return jnp.where(h >= 0, h, LEAKY_SLOPE * h)

    h = lrelu(bn(lin(x, params["enc_w1"], params["enc_b1"]),
                 params["enc_gamma"], params["enc_beta"]))
    stats = lin(h, params["enc_w2"], params["enc_b2"])
    mean, log_var = stats[:, :latent_dim], stats[:, latent_dim:]
    z = mean + eps_noise * jnp.exp(0.5 * log_var)
    g = lrelu(bn(lin(z, params["dec_w1"], params["dec_b1"]),
                 params["dec_gamma"], params["dec_beta"]))
    recon = lin(g, params["dec_w2"], params["dec_b2"])
    return recon, mean, log_var


if __name__ == "__main__":
    # Batch 128 fills MXU rows; intermediate_dim=256 fills the 256-wide MXU on
    # v6e/v7x (v5e's 128-wide MXU is full either way).
    B, INPUT_DIM, INTERMEDIATE_DIM, LATENT_DIM = 128, 256, 256, 64

    key = jax.random.PRNGKey(0)
    k_x, k_eps, k_params = jax.random.split(key, 3)

    x = jax.random.normal(k_x, (B, INPUT_DIM), jnp.float32)
    eps_noise = jax.random.normal(k_eps, (B, LATENT_DIM), jnp.float32)
    params = init_params(k_params, INPUT_DIM, INTERMEDIATE_DIM, LATENT_DIM)

    # Pack ONCE (hoisted out of the forward path).
    packed = pack_params(params, LATENT_DIM)
    jax.block_until_ready(packed)

    recon, mean, log_var = beta_vae_forward(
        x, eps_noise, packed, latent_dim=LATENT_DIM)
    jax.block_until_ready((recon, mean, log_var))

    # Correctness check against the pure-JAX reference (same matmul precision;
    # tolerance covers exact-cancelled pre-BN biases, BN folding and the
    # one-pass variance).
    r_ref, m_ref, lv_ref = reference_forward(x, eps_noise, params, LATENT_DIM)
    assert jnp.allclose(recon, r_ref, atol=1e-2, rtol=1e-2)
    assert jnp.allclose(mean, m_ref, atol=1e-2, rtol=1e-2)
    assert jnp.allclose(log_var, lv_ref, atol=1e-2, rtol=1e-2)

    print("KERNEL_OK")
</pallas_src>

<mosaic_0001>
module attributes {stable_mosaic.version = 11 : i64} {
  func.func @beta_vae_kernel(%arg0: memref<128x256xbf16, #tpu.memory_space<vmem>>, %arg1: memref<128x128xf32, #tpu.memory_space<vmem>>, %arg2: memref<256x256xbf16, #tpu.memory_space<vmem>>, %arg3: memref<256x256xbf16, #tpu.memory_space<vmem>>, %arg4: memref<128x256xbf16, #tpu.memory_space<vmem>>, %arg5: memref<256x256xbf16, #tpu.memory_space<vmem>>, %arg6: memref<8x256xf32, #tpu.memory_space<vmem>>, %arg7: memref<128x256xf32, #tpu.memory_space<vmem>>, %arg8: memref<128x256xf32, #tpu.memory_space<vmem>>) attributes {dimension_semantics = [], scalar_prefetch = 0 : i64, scratch_operands = 0 : i64, tpu.core_type = #tpu.core_type<tc>} {
    %c0 = arith.constant 0 : index
    %c0_0 = arith.constant 0 : index
    %0 = vector.load %arg6[%c0, %c0_0] : memref<8x256xf32, #tpu.memory_space<vmem>>, vector<1x256xf32>
    %c1 = arith.constant 1 : index
    %c0_1 = arith.constant 0 : index
    %1 = vector.load %arg6[%c1, %c0_1] : memref<8x256xf32, #tpu.memory_space<vmem>>, vector<1x256xf32>
    %c2 = arith.constant 2 : index
    %c0_2 = arith.constant 0 : index
    %2 = vector.load %arg6[%c2, %c0_2] : memref<8x256xf32, #tpu.memory_space<vmem>>, vector<1x256xf32>
    %c3 = arith.constant 3 : index
    %c0_3 = arith.constant 0 : index
    %3 = vector.load %arg6[%c3, %c0_3] : memref<8x256xf32, #tpu.memory_space<vmem>>, vector<1x256xf32>
    %c4 = arith.constant 4 : index
    %c0_4 = arith.constant 0 : index
    %4 = vector.load %arg6[%c4, %c0_4] : memref<8x256xf32, #tpu.memory_space<vmem>>, vector<1x256xf32>
    %c5 = arith.constant 5 : index
    %c0_5 = arith.constant 0 : index
    %5 = vector.load %arg6[%c5, %c0_5] : memref<8x256xf32, #tpu.memory_space<vmem>>, vector<1x256xf32>
    %c0_6 = arith.constant 0 : index
    %c0_7 = arith.constant 0 : index
    %6 = vector.load %arg0[%c0_6, %c0_7] : memref<128x256xbf16, #tpu.memory_space<vmem>>, vector<128x256xbf16>
    %c0_8 = arith.constant 0 : index
    %c0_9 = arith.constant 0 : index
    %7 = vector.load %arg2[%c0_8, %c0_9] : memref<256x256xbf16, #tpu.memory_space<vmem>>, vector<256x256xbf16>
    %cst = arith.constant dense<0.000000e+00> : vector<128x256xf32>
    %8 = tpu.matmul %6, %7, %cst {dimension_numbers = #tpu.dot_dimension_numbers<[1], [0], [0], [1], [0, 0, 1, 1], [], []>} : vector<128x256xbf16>, vector<256x256xbf16>, vector<128x256xf32> -> vector<128x256xf32>
    %cst_10 = arith.constant dense<0.000000e+00> : vector<256xf32>
    %9 = vector.multi_reduction <add>, %8, %cst_10 [0] : vector<128x256xf32> to vector<256xf32>
    %10 = vector.shape_cast %9 : vector<256xf32> to vector<1x256xf32>
    %cst_11 = arith.constant 1.280000e+02 : f32
    %11 = vector.broadcast %cst_11 : f32 to vector<1x256xf32>
    %12 = arith.divf %10, %11 : vector<1x256xf32>
    %13 = arith.mulf %8, %8 : vector<128x256xf32>
    %cst_12 = arith.constant dense<0.000000e+00> : vector<256xf32>
    %14 = vector.multi_reduction <add>, %13, %cst_12 [0] : vector<128x256xf32> to vector<256xf32>
    %15 = vector.shape_cast %14 : vector<256xf32> to vector<1x256xf32>
    %cst_13 = arith.constant 1.280000e+02 : f32
    %16 = vector.broadcast %cst_13 : f32 to vector<1x256xf32>
    %17 = arith.divf %15, %16 : vector<1x256xf32>
    %18 = arith.mulf %12, %12 : vector<1x256xf32>
    %19 = arith.subf %17, %18 : vector<1x256xf32>
    %cst_14 = arith.constant 9.99999974E-6 : f32
    %20 = vector.broadcast %cst_14 : f32 to vector<1x256xf32>
    %21 = arith.addf %19, %20 : vector<1x256xf32>
    %22 = math.rsqrt %21 : vector<1x256xf32>
    %23 = arith.mulf %0, %22 : vector<1x256xf32>
    %24 = arith.mulf %12, %23 : vector<1x256xf32>
    %25 = arith.subf %1, %24 : vector<1x256xf32>
    %26 = vector.broadcast %23 : vector<1x256xf32> to vector<128x256xf32>
    %27 = arith.mulf %8, %26 : vector<128x256xf32>
    %28 = vector.broadcast %25 : vector<1x256xf32> to vector<128x256xf32>
    %29 = arith.addf %27, %28 : vector<128x256xf32>
    %cst_15 = arith.constant 0.000000e+00 : f32
    %30 = vector.broadcast %cst_15 : f32 to vector<128x256xf32>
    %31 = arith.cmpf oge, %29, %30 : vector<128x256xf32>
    %cst_16 = arith.constant 0.00999999977 : f32
    %32 = vector.broadcast %cst_16 : f32 to vector<128x256xf32>
    %33 = arith.mulf %32, %29 : vector<128x256xf32>
    %34 = arith.select %31, %29, %33 : vector<128x256xi1>, vector<128x256xf32>
    %35 = arith.truncf %34 : vector<128x256xf32> to vector<128x256xbf16>
    %c0_17 = arith.constant 0 : index
    %c0_18 = arith.constant 0 : index
    %36 = vector.load %arg3[%c0_17, %c0_18] : memref<256x256xbf16, #tpu.memory_space<vmem>>, vector<256x256xbf16>
    %cst_19 = arith.constant dense<0.000000e+00> : vector<128x256xf32>
    %37 = tpu.matmul %35, %36, %cst_19 {dimension_numbers = #tpu.dot_dimension_numbers<[1], [0], [0], [1], [0, 0, 1, 1], [], []>} : vector<128x256xbf16>, vector<256x256xbf16>, vector<128x256xf32> -> vector<128x256xf32>
    %38 = vector.broadcast %2 : vector<1x256xf32> to vector<128x256xf32>
    %39 = arith.addf %37, %38 : vector<128x256xf32>
    %40 = vector.extract_strided_slice %39 {offsets = [0, 0], sizes = [128, 128], strides = [1, 1]} : vector<128x256xf32> to vector<128x128xf32>
    %41 = vector.extract_strided_slice %39 {offsets = [0, 128], sizes = [128, 128], strides = [1, 1]} : vector<128x256xf32> to vector<128x128xf32>
    %c0_20 = arith.constant 0 : index
    %c0_21 = arith.constant 0 : index
    %42 = vector.load %arg1[%c0_20, %c0_21] : memref<128x128xf32, #tpu.memory_space<vmem>>, vector<128x128xf32>
    %cst_22 = arith.constant 5.000000e-01 : f32
    %43 = vector.broadcast %cst_22 : f32 to vector<128x128xf32>
    %44 = arith.mulf %43, %41 : vector<128x128xf32>
    %45 = math.exp %44 : vector<128x128xf32>
    %46 = arith.mulf %42, %45 : vector<128x128xf32>
    %47 = arith.addf %40, %46 : vector<128x128xf32>
    %48 = arith.truncf %47 : vector<128x128xf32> to vector<128x128xbf16>
    %c0_23 = arith.constant 0 : index
    %c0_24 = arith.constant 0 : index
    %49 = vector.load %arg4[%c0_23, %c0_24] : memref<128x256xbf16, #tpu.memory_space<vmem>>, vector<128x256xbf16>
    %cst_25 = arith.constant dense<0.000000e+00> : vector<128x256xf32>
    %50 = tpu.matmul %48, %49, %cst_25 {dimension_numbers = #tpu.dot_dimension_numbers<[1], [0], [0], [1], [0, 0, 1, 1], [], []>} : vector<128x128xbf16>, vector<128x256xbf16>, vector<128x256xf32> -> vector<128x256xf32>
    %cst_26 = arith.constant dense<0.000000e+00> : vector<256xf32>
    %51 = vector.multi_reduction <add>, %50, %cst_26 [0] : vector<128x256xf32> to vector<256xf32>
    %52 = vector.shape_cast %51 : vector<256xf32> to vector<1x256xf32>
    %cst_27 = arith.constant 1.280000e+02 : f32
    %53 = vector.broadcast %cst_27 : f32 to vector<1x256xf32>
    %54 = arith.divf %52, %53 : vector<1x256xf32>
    %55 = arith.mulf %50, %50 : vector<128x256xf32>
    %cst_28 = arith.constant dense<0.000000e+00> : vector<256xf32>
    %56 = vector.multi_reduction <add>, %55, %cst_28 [0] : vector<128x256xf32> to vector<256xf32>
    %57 = vector.shape_cast %56 : vector<256xf32> to vector<1x256xf32>
    %cst_29 = arith.constant 1.280000e+02 : f32
    %58 = vector.broadcast %cst_29 : f32 to vector<1x256xf32>
    %59 = arith.divf %57, %58 : vector<1x256xf32>
    %60 = arith.mulf %54, %54 : vector<1x256xf32>
    %61 = arith.subf %59, %60 : vector<1x256xf32>
    %cst_30 = arith.constant 9.99999974E-6 : f32
    %62 = vector.broadcast %cst_30 : f32 to vector<1x256xf32>
    %63 = arith.addf %61, %62 : vector<1x256xf32>
    %64 = math.rsqrt %63 : vector<1x256xf32>
    %65 = arith.mulf %3, %64 : vector<1x256xf32>
    %66 = arith.mulf %54, %65 : vector<1x256xf32>
    %67 = arith.subf %4, %66 : vector<1x256xf32>
    %68 = vector.broadcast %65 : vector<1x256xf32> to vector<128x256xf32>
    %69 = arith.mulf %50, %68 : vector<128x256xf32>
    %70 = vector.broadcast %67 : vector<1x256xf32> to vector<128x256xf32>
    %71 = arith.addf %69, %70 : vector<128x256xf32>
    %cst_31 = arith.constant 0.000000e+00 : f32
    %72 = vector.broadcast %cst_31 : f32 to vector<128x256xf32>
    %73 = arith.cmpf oge, %71, %72 : vector<128x256xf32>
    %cst_32 = arith.constant 0.00999999977 : f32
    %74 = vector.broadcast %cst_32 : f32 to vector<128x256xf32>
    %75 = arith.mulf %74, %71 : vector<128x256xf32>
    %76 = arith.select %73, %71, %75 : vector<128x256xi1>, vector<128x256xf32>
    %77 = arith.truncf %76 : vector<128x256xf32> to vector<128x256xbf16>
    %c0_33 = arith.constant 0 : index
    %c0_34 = arith.constant 0 : index
    %78 = vector.load %arg5[%c0_33, %c0_34] : memref<256x256xbf16, #tpu.memory_space<vmem>>, vector<256x256xbf16>
    %cst_35 = arith.constant dense<0.000000e+00> : vector<128x256xf32>
    %79 = tpu.matmul %77, %78, %cst_35 {dimension_numbers = #tpu.dot_dimension_numbers<[1], [0], [0], [1], [0, 0, 1, 1], [], []>} : vector<128x256xbf16>, vector<256x256xbf16>, vector<128x256xf32> -> vector<128x256xf32>
    %80 = vector.broadcast %5 : vector<1x256xf32> to vector<128x256xf32>
    %81 = arith.addf %79, %80 : vector<128x256xf32>
    %c0_36 = arith.constant 0 : index
    %c0_37 = arith.constant 0 : index
    %82 = vector.load %arg7[%c0_36, %c0_37] : memref<128x256xf32, #tpu.memory_space<vmem>>, vector<128x256xf32>
    tpu.vector_store %arg7[%c0_36, %c0_37], %81 {strides = array<i32>} : memref<128x256xf32, #tpu.memory_space<vmem>>, vector<128x256xf32>,
    %c0_38 = arith.constant 0 : index
    %c0_39 = arith.constant 0 : index
    %83 = vector.load %arg8[%c0_38, %c0_39] : memref<128x256xf32, #tpu.memory_space<vmem>>, vector<128x256xf32>
    tpu.vector_store %arg8[%c0_38, %c0_39], %39 {strides = array<i32>} : memref<128x256xf32, #tpu.memory_space<vmem>>, vector<128x256xf32>,
    return
  }
}

</mosaic_0001>

<llo_original>
// kernel: beta_vae_forward.1
$region0: #{beta_vae_forward.1}
  #allocation0 [shape = 'u32[]', space=smem, size = 0x4, offset = 0x4, fixed_abs, tag = 'smem constant byte address 0x4 - core index']
  #allocation1 [shape = 'u32[144,128]{1,0:T(1,128)}', space=vmem, size = 0x12000, scoped, tag = 'internal scratch']
  %s0 = inlined_call_operand.vmem [shape: bf16[128,256], index: 0, kind: input, shape index: {}]
  %s1 = inlined_call_operand.vmem [shape: f32[128,128], index: 1, kind: input, shape index: {}]
  %s2 = inlined_call_operand.vmem [shape: bf16[256,256], index: 2, kind: input, shape index: {}]
  %s3 = inlined_call_operand.vmem [shape: bf16[256,256], index: 3, kind: input, shape index: {}]
  %s4 = inlined_call_operand.hbm [shape: bf16[128,256], index: 4, kind: input, shape index: {}]
  %s5 = inlined_call_operand.vmem [shape: bf16[256,256], index: 5, kind: input, shape index: {}]
  %s6 = inlined_call_operand.vmem [shape: f32[8,256], index: 6, kind: input, shape index: {}]
  %s7 = inlined_call_operand.hbm [shape: f32[128,256], index: 7, kind: output, shape index: {0}]
  %s8 = inlined_call_operand.vmem [shape: f32[128,256], index: 8, kind: output, shape index: {1}]
  %9 = xla_tuple %s7, %s8
  %s10 = sld [smem:[#allocation0]]
  $region50: #{beta_vae_forward.1} parent=0
    _
  %s12 = ssub.s32 1, %s10
  %s13 = scalar_select 0, %s12, %s10
  $region1: #{beta_vae_forward.1} parent=0
    #allocation2 [shape = 'u8[65536]{0}', space=vmem, size = 0x10000, scoped, tag = 'input window, operand 4, single buffered']
    #allocation3 [shape = 's32[1]{0}', space=sflag, size = 0x4, scoped, tag = 'scoped memory for beta_vae_forward.1']
    #allocation4 [shape = 's32[1]{0}', space=sflag, size = 0x4, scoped, tag = 'scoped memory for beta_vae_forward.1']
    #allocation5 [shape = 'u8[131072]{0}', space=vmem, size = 0x20000, scoped, tag = 'output window, operand 0, single buffered']
    %14 = vsyncpa [#allocation3], 0
    %15 = vsyncpa [#allocation4], 0
    // Predicated region
    $region2: #{beta_vae_forward.1} parent=1 // pred_check
      _
    $region3: #{beta_vae_forward.1} parent=1 // pred_check_branch
      %17 = sbr.rel (0) target = $region5
    $region4: #{beta_vae_forward.1} parent=1 // pred_region
      _
    $region5: #{beta_vae_forward.1} parent=1 // pred_fallthru
      _
    // Predicated region
    $region6: #{beta_vae_forward.1} parent=1 // pred_check
      _
    $region7: #{beta_vae_forward.1} parent=1 // pred_check_branch
      %19 = sbr.rel (0) target = $region9
    $region8: #{beta_vae_forward.1} parent=1 // pred_region
      _
    $region9: #{beta_vae_forward.1} parent=1 // pred_fallthru
      _
    // Predicated region
    $region10: #{beta_vae_forward.1} parent=1 // pred_check
      _
    $region11: #{beta_vae_forward.1} parent=1 // pred_check_branch
      %21 = sbr.rel (0) target = $region13
    $region12: #{beta_vae_forward.1} parent=1 // pred_region
      _
    $region13: #{beta_vae_forward.1} parent=1 // pred_fallthru
      _
    // Predicated region
    $region14: #{beta_vae_forward.1} parent=1 // pred_check
      _
    $region15: #{beta_vae_forward.1} parent=1 // pred_check_branch
      %23 = sbr.rel (0) target = $region17
    $region16: #{beta_vae_forward.1} parent=1 // pred_region
      _
    $region17: #{beta_vae_forward.1} parent=1 // pred_fallthru
      _
    // Predicated region
    $region18: #{beta_vae_forward.1} parent=1 // pred_check
      _
    $region19: #{beta_vae_forward.1} parent=1 // pred_check_branch
      %25 = sbr.rel (0) target = $region21
    $region20: #{beta_vae_forward.1} parent=1 // pred_region
      %s27 = ssub.s32 2048, 2048
      %28 = vsyncadd [#allocation3], %s27
      %s29 = sshll.u32 [#allocation2], 4
      %s30 = int_to_ptr.vmem [resolvable:$true] %s29
      %35 = dma.hbm_to_vmem [thread:$0]  %s4, 2048, %s30, [#allocation3], 128, 128, 8
    $region21: #{beta_vae_forward.1} parent=1 // pred_fallthru
      _
    // Predicated region
    $region22: #{beta_vae_forward.1} parent=1 // pred_check
      _
    $region23: #{beta_vae_forward.1} parent=1 // pred_check_branch
      %37 = sbr.rel (0) target = $region25
    $region24: #{beta_vae_forward.1} parent=1 // pred_region
      _
    $region25: #{beta_vae_forward.1} parent=1 // pred_fallthru
      _
    // Predicated region
    $region26: #{beta_vae_forward.1} parent=1 // pred_check
      _
    $region27: #{beta_vae_forward.1} parent=1 // pred_check_branch
      %39 = sbr.rel (0) target = $region29
    $region28: #{beta_vae_forward.1} parent=1 // pred_region
      _
    $region29: #{beta_vae_forward.1} parent=1 // pred_fallthru
      _
    // Predicated region
    $region30: #{beta_vae_forward.1} parent=1 // pred_check
      _
    $region31: #{beta_vae_forward.1} parent=1 // pred_check_branch
      %41 = sbr.rel (0) target = $region33
    $region32: #{beta_vae_forward.1} parent=1 // pred_region
      %42 = dma.done [#allocation3], 2048
    $region33: #{beta_vae_forward.1} parent=1 // pred_fallthru
      _
    %v44 = vld [vmem:[%s6] ss:$8 sm:$0x3]
    %s45 = scalar_lea.vmem %s6, 1
    %v46 = vld [vmem:[%s45] ss:$8 sm:$0x3]
    %s47 = scalar_lea.vmem %s6, 2
    %v48 = vld [vmem:[%s47] ss:$8 sm:$0x3]
    %s49 = scalar_lea.vmem %s6, 3
    %v50 = vld [vmem:[%s49] ss:$8 sm:$0x3]
    %s51 = scalar_lea.vmem %s6, 4
    %v52 = vld [vmem:[%s51] ss:$8 sm:$0x3]
    %s53 = scalar_lea.vmem %s6, 5
    %v54 = vld [vmem:[%s53] ss:$8 sm:$0x3]
    %v55 = vld [vmem:[%s0] sm:$0xff]
    %v56 = vld [vmem:[%s0 + $0x8] sm:$0xff]
    %v57 = vld [vmem:[%s0 + $0x10] sm:$0xff]
    %v58 = vld [vmem:[%s0 + $0x18] sm:$0xff]
    %v59 = vld [vmem:[%s0 + $0x20] sm:$0xff]
    %v60 = vld [vmem:[%s0 + $0x28] sm:$0xff]
    %v61 = vld [vmem:[%s0 + $0x30] sm:$0xff]
    %v62 = vld [vmem:[%s0 + $0x38] sm:$0xff]
    %v63 = vld [vmem:[%s0 + $0x40] sm:$0xff]
    %v64 = vld [vmem:[%s0 + $0x48] sm:$0xff]
    %v65 = vld [vmem:[%s0 + $0x50] sm:$0xff]
    %v66 = vld [vmem:[%s0 + $0x58] sm:$0xff]
    %v67 = vld [vmem:[%s0 + $0x60] sm:$0xff]
    %v68 = vld [vmem:[%s0 + $0x68] sm:$0xff]
    %v69 = vld [vmem:[%s0 + $0x70] sm:$0xff]
    %v70 = vld [vmem:[%s0 + $0x78] sm:$0xff]
    %v71 = vld [vmem:[%s2] sm:$0xff]
    %v72 = vld [vmem:[%s2 + $0x8] sm:$0xff]
    %v73 = vld [vmem:[%s2 + $0x10] sm:$0xff]
    %v74 = vld [vmem:[%s2 + $0x18] sm:$0xff]
    %v75 = vld [vmem:[%s2 + $0x20] sm:$0xff]
    %v76 = vld [vmem:[%s2 + $0x28] sm:$0xff]
    %v77 = vld [vmem:[%s2 + $0x30] sm:$0xff]
    %v78 = vld [vmem:[%s2 + $0x38] sm:$0xff]
    %v79 = vld [vmem:[%s2 + $0x40] sm:$0xff]
    %v80 = vld [vmem:[%s2 + $0x48] sm:$0xff]
    %v81 = vld [vmem:[%s2 + $0x50] sm:$0xff]
    %v82 = vld [vmem:[%s2 + $0x58] sm:$0xff]
    %v83 = vld [vmem:[%s2 + $0x60] sm:$0xff]
    %v84 = vld [vmem:[%s2 + $0x68] sm:$0xff]
    %v85 = vld [vmem:[%s2 + $0x70] sm:$0xff]
    %v86 = vld [vmem:[%s2 + $0x78] sm:$0xff]
    %v87 = vld [vmem:[%s2 + $0x80] sm:$0xff]
    %v88 = vld [vmem:[%s2 + $0x88] sm:$0xff]
    %v89 = vld [vmem:[%s2 + $0x90] sm:$0xff]
    %v90 = vld [vmem:[%s2 + $0x98] sm:$0xff]
    %v91 = vld [vmem:[%s2 + $0xa0] sm:$0xff]
    %v92 = vld [vmem:[%s2 + $0xa8] sm:$0xff]
    %v93 = vld [vmem:[%s2 + $0xb0] sm:$0xff]
    %v94 = vld [vmem:[%s2 + $0xb8] sm:$0xff]
    %v95 = vld [vmem:[%s2 + $0xc0] sm:$0xff]
    %v96 = vld [vmem:[%s2 + $0xc8] sm:$0xff]
    %v97 = vld [vmem:[%s2 + $0xd0] sm:$0xff]
    %v98 = vld [vmem:[%s2 + $0xd8] sm:$0xff]
    %v99 = vld [vmem:[%s2 + $0xe0] sm:$0xff]
    %v100 = vld [vmem:[%s2 + $0xe8] sm:$0xff]
    %v101 = vld [vmem:[%s2 + $0xf0] sm:$0xff]
    %v102 = vld [vmem:[%s2 + $0xf8] sm:$0xff]
    %v119 = vunpack.c.l.b16 %v55
    %v120 = vunpack.c.h.b16 %v55
    %v121 = vunpack.c.l.b16 %v56
    %v122 = vunpack.c.h.b16 %v56
    %v123 = vunpack.c.l.b16 %v57
    %v124 = vunpack.c.h.b16 %v57
    %v125 = vunpack.c.l.b16 %v58
    %v126 = vunpack.c.h.b16 %v58
    %v127 = vunpack.c.l.b16 %v59
    %v128 = vunpack.c.h.b16 %v59
    %v129 = vunpack.c.l.b16 %v60
    %v130 = vunpack.c.h.b16 %v60
    %v131 = vunpack.c.l.b16 %v61
    %v132 = vunpack.c.h.b16 %v61
    %v133 = vunpack.c.l.b16 %v62
    %v134 = vunpack.c.h.b16 %v62
    %v135 = vunpack.c.l.b16 %v63
    %v136 = vunpack.c.h.b16 %v63
    %v137 = vunpack.c.l.b16 %v64
    %v138 = vunpack.c.h.b16 %v64
    %v139 = vunpack.c.l.b16 %v65
    %v140 = vunpack.c.h.b16 %v65
    %v141 = vunpack.c.l.b16 %v66
    %v142 = vunpack.c.h.b16 %v66
    %v143 = vunpack.c.l.b16 %v67
    %v144 = vunpack.c.h.b16 %v67
    %v145 = vunpack.c.l.b16 %v68
    %v146 = vunpack.c.h.b16 %v68
    %v147 = vunpack.c.l.b16 %v69
    %v148 = vunpack.c.h.b16 %v69
    %v149 = vunpack.c.l.b16 %v70
    %v150 = vunpack.c.h.b16 %v70
    %v151 = vpack.c.b16 %v121, %v119
    %v152 = vpack.c.b16 %v122, %v120
    %v153 = vpack.c.b16 %v125, %v123
    %v154 = vpack.c.b16 %v126, %v124
    %v155 = vpack.c.b16 %v129, %v127
    %v156 = vpack.c.b16 %v130, %v128
    %v157 = vpack.c.b16 %v133, %v131
    %v158 = vpack.c.b16 %v134, %v132
    %v159 = vpack.c.b16 %v137, %v135
    %v160 = vpack.c.b16 %v138, %v136
    %v161 = vpack.c.b16 %v141, %v139
    %v162 = vpack.c.b16 %v142, %v140
    %v163 = vpack.c.b16 %v145, %v143
    %v164 = vpack.c.b16 %v146, %v144
    %v165 = vpack.c.b16 %v149, %v147
    %v166 = vpack.c.b16 %v150, %v148
    %v215 = vunpack.c.l.b16 %v71
    %v216 = vunpack.c.h.b16 %v71
    %v217 = vunpack.c.l.b16 %v72
    %v218 = vunpack.c.h.b16 %v72
    %v219 = vunpack.c.l.b16 %v73
    %v220 = vunpack.c.h.b16 %v73
    %v221 = vunpack.c.l.b16 %v74
    %v222 = vunpack.c.h.b16 %v74
    %v223 = vunpack.c.l.b16 %v75
    %v224 = vunpack.c.h.b16 %v75
    %v225 = vunpack.c.l.b16 %v76
    %v226 = vunpack.c.h.b16 %v76
    %v227 = vunpack.c.l.b16 %v77
    %v228 = vunpack.c.h.b16 %v77
    %v229 = vunpack.c.l.b16 %v78
    %v230 = vunpack.c.h.b16 %v78
    %v231 = vunpack.c.l.b16 %v79
    %v232 = vunpack.c.h.b16 %v79
    %v233 = vunpack.c.l.b16 %v80
    %v234 = vunpack.c.h.b16 %v80
    %v235 = vunpack.c.l.b16 %v81
    %v236 = vunpack.c.h.b16 %v81
    %v237 = vunpack.c.l.b16 %v82
    %v238 = vunpack.c.h.b16 %v82
    %v239 = vunpack.c.l.b16 %v83
    %v240 = vunpack.c.h.b16 %v83
    %v241 = vunpack.c.l.b16 %v84
    %v242 = vunpack.c.h.b16 %v84
    %v243 = vunpack.c.l.b16 %v85
    %v244 = vunpack.c.h.b16 %v85
    %v245 = vunpack.c.l.b16 %v86
    %v246 = vunpack.c.h.b16 %v86
    %v247 = vunpack.c.l.b16 %v87
    %v248 = vunpack.c.h.b16 %v87
    %v249 = vunpack.c.l.b16 %v88
    %v250 = vunpack.c.h.b16 %v88
    %v251 = vunpack.c.l.b16 %v89
    %v252 = vunpack.c.h.b16 %v89
    %v253 = vunpack.c.l.b16 %v90
    %v254 = vunpack.c.h.b16 %v90
    %v255 = vunpack.c.l.b16 %v91
    %v256 = vunpack.c.h.b16 %v91
    %v257 = vunpack.c.l.b16 %v92
    %v258 = vunpack.c.h.b16 %v92
    %v259 = vunpack.c.l.b16 %v93
    %v260 = vunpack.c.h.b16 %v93
    %v261 = vunpack.c.l.b16 %v94
    %v262 = vunpack.c.h.b16 %v94
    %v263 = vunpack.c.l.b16 %v95
    %v264 = vunpack.c.h.b16 %v95
    %v265 = vunpack.c.l.b16 %v96
    %v266 = vunpack.c.h.b16 %v96
    %v267 = vunpack.c.l.b16 %v97
    %v268 = vunpack.c.h.b16 %v97
    %v269 = vunpack.c.l.b16 %v98
    %v270 = vunpack.c.h.b16 %v98
    %v271 = vunpack.c.l.b16 %v99
    %v272 = vunpack.c.h.b16 %v99
    %v273 = vunpack.c.l.b16 %v100
    %v274 = vunpack.c.h.b16 %v100
    %v275 = vunpack.c.l.b16 %v101
    %v276 = vunpack.c.h.b16 %v101
    %v277 = vunpack.c.l.b16 %v102
    %v278 = vunpack.c.h.b16 %v102
    %v279 = vpack.c.b16 %v217, %v215
    %v280 = vpack.c.b16 %v218, %v216
    %v281 = vpack.c.b16 %v221, %v219
    %v282 = vpack.c.b16 %v222, %v220
    %v283 = vpack.c.b16 %v225, %v223
    %v284 = vpack.c.b16 %v226, %v224
    %v285 = vpack.c.b16 %v229, %v227
    %v286 = vpack.c.b16 %v230, %v228
    %v287 = vpack.c.b16 %v233, %v231
    %v288 = vpack.c.b16 %v234, %v232
    %v289 = vpack.c.b16 %v237, %v235
    %v290 = vpack.c.b16 %v238, %v236
    %v291 = vpack.c.b16 %v241, %v239
    %v292 = vpack.c.b16 %v242, %v240
    %v293 = vpack.c.b16 %v245, %v243
    %v294 = vpack.c.b16 %v246, %v244
    %v295 = vpack.c.b16 %v249, %v247
    %v296 = vpack.c.b16 %v250, %v248
    %v297 = vpack.c.b16 %v253, %v251
    %v298 = vpack.c.b16 %v254, %v252
    %v299 = vpack.c.b16 %v257, %v255
    %v300 = vpack.c.b16 %v258, %v256
    %v301 = vpack.c.b16 %v261, %v259
    %v302 = vpack.c.b16 %v262, %v260
    %v303 = vpack.c.b16 %v265, %v263
    %v304 = vpack.c.b16 %v266, %v264
    %v305 = vpack.c.b16 %v269, %v267
    %v306 = vpack.c.b16 %v270, %v268
    %v307 = vpack.c.b16 %v273, %v271
    %v308 = vpack.c.b16 %v274, %v272
    %v309 = vpack.c.b16 %v277, %v275
    %v310 = vpack.c.b16 %v278, %v276
    %343 = vmatprep.subr.bf16.mxu0 %v294
    %344 = vmatpush1.bf16.msra.mxu0 %v293
    %345 = vmatprep.subr.bf16.mxu0 %v292
    %346 = vmatpush1.bf16.msra.mxu0 %v291
    %347 = vmatprep.subr.bf16.mxu0 %v290
    %348 = vmatpush1.bf16.msra.mxu0 %v289
    %349 = vmatprep.subr.bf16.mxu0 %v288
    %350 = vmatpush1.bf16.msra.mxu0 %v287
    %351 = vmatprep.subr.bf16.mxu0 %v286
    %352 = vmatpush1.bf16.msra.mxu0 %v285
    %353 = vmatprep.subr.bf16.mxu0 %v284
    %354 = vmatpush1.bf16.msra.mxu0 %v283
    %355 = vmatprep.subr.bf16.mxu0 %v282
    %356 = vmatpush1.bf16.msra.mxu0 %v281
    %357 = vmatprep.subr.bf16.mxu0 %v280
    %358 = vmatpush1.bf16.msra.mxu0 %v279
    %359 = vmatprep.subr.bf16.mxu0 %v310
    %360 = vmatpush2.bf16.msra.mxu0 %v309
    %361 = vmatprep.subr.bf16.mxu0 %v308
    %362 = vmatpush2.bf16.msra.mxu0 %v307
    %363 = vmatprep.subr.bf16.mxu0 %v306
    %364 = vmatpush2.bf16.msra.mxu0 %v305
    %365 = vmatprep.subr.bf16.mxu0 %v304
    %366 = vmatpush2.bf16.msra.mxu0 %v303
    %367 = vmatprep.subr.bf16.mxu0 %v302
    %368 = vmatpush2.bf16.msra.mxu0 %v301
    %369 = vmatprep.subr.bf16.mxu0 %v300
    %370 = vmatpush2.bf16.msra.mxu0 %v299
    %371 = vmatprep.subr.bf16.mxu0 %v298
    %372 = vmatpush2.bf16.msra.mxu0 %v297
    %373 = vmatprep.subr.bf16.mxu0 %v296
    %374 = vmatpush2.bf16.msra.mxu0 %v295
    %375 = vmatprep.mubr.bf16.mxu0 %v152
    %376 = vmatmul.mubr.bf16.gmra.mxu0 %v151
    %v377 = vpop.f32.mrf.mxu0
    %v378 = vadd.f32 0.0, %v377
    %v379 = vpop.f32.mrf.mxu0
    %v380 = vadd.f32 0.0, %v379
    %v381 = vpop.f32.mrf.mxu0
    %v382 = vadd.f32 0.0, %v381
    %v383 = vpop.f32.mrf.mxu0
    %v384 = vadd.f32 0.0, %v383
    %385 = vmatprep.mubr.bf16.mxu0 %v154
    %386 = vmatmul.mubr.bf16.gmra.mxu0 %v153
    %v387 = vpop.f32.mrf.mxu0
    %v388 = vadd.f32 0.0, %v387
    %v389 = vpop.f32.mrf.mxu0
    %v390 = vadd.f32 0.0, %v389
    %v391 = vpop.f32.mrf.mxu0
    %v392 = vadd.f32 0.0, %v391
    %v393 = vpop.f32.mrf.mxu0
    %v394 = vadd.f32 0.0, %v393
    %395 = vmatprep.mubr.bf16.mxu0 %v156
    %396 = vmatmul.mubr.bf16.gmra.mxu0 %v155
    %v397 = vpop.f32.mrf.mxu0
    %v398 = vadd.f32 0.0, %v397
    %v399 = vpop.f32.mrf.mxu0
    %v400 = vadd.f32 0.0, %v399
    %v401 = vpop.f32.mrf.mxu0
    %v402 = vadd.f32 0.0, %v401
    %v403 = vpop.f32.mrf.mxu0
    %v404 = vadd.f32 0.0, %v403
    %405 = vmatprep.mubr.bf16.mxu0 %v158
    %406 = vmatmul.mubr.bf16.gmra.mxu0 %v157
    %v407 = vpop.f32.mrf.mxu0
    %v408 = vadd.f32 0.0, %v407
    %v409 = vpop.f32.mrf.mxu0
    %v410 = vadd.f32 0.0, %v409
    %v411 = vpop.f32.mrf.mxu0
    %v412 = vadd.f32 0.0, %v411
    %v413 = vpop.f32.mrf.mxu0
    %v414 = vadd.f32 0.0, %v413
    %415 = vmatprep.mubr.bf16.mxu0 %v160
    %416 = vmatmul.mubr.bf16.gmra.mxu0 %v159
    %v417 = vpop.f32.mrf.mxu0
    %v418 = vadd.f32 0.0, %v417
    %v419 = vpop.f32.mrf.mxu0
    %v420 = vadd.f32 0.0, %v419
    %v421 = vpop.f32.mrf.mxu0
    %v422 = vadd.f32 0.0, %v421
    %v423 = vpop.f32.mrf.mxu0
    %v424 = vadd.f32 0.0, %v423
    %425 = vmatprep.mubr.bf16.mxu0 %v162
    %426 = vmatmul.mubr.bf16.gmra.mxu0 %v161
    %v427 = vpop.f32.mrf.mxu0
    %v428 = vadd.f32 0.0, %v427
    %v429 = vpop.f32.mrf.mxu0
    %v430 = vadd.f32 0.0, %v429
    %v431 = vpop.f32.mrf.mxu0
    %v432 = vadd.f32 0.0, %v431
    %v433 = vpop.f32.mrf.mxu0
    %v434 = vadd.f32 0.0, %v433
    %435 = vmatprep.mubr.bf16.mxu0 %v164
    %436 = vmatmul.mubr.bf16.gmra.mxu0 %v163
    %v437 = vpop.f32.mrf.mxu0
    %v438 = vadd.f32 0.0, %v437
    %v439 = vpop.f32.mrf.mxu0
    %v440 = vadd.f32 0.0, %v439
    %v441 = vpop.f32.mrf.mxu0
    %v442 = vadd.f32 0.0, %v441
    %v443 = vpop.f32.mrf.mxu0
    %v444 = vadd.f32 0.0, %v443
    %445 = vmatprep.mubr.bf16.mxu0 %v166
    %446 = vmatmul.mubr.bf16.gmra.mxu0 %v165
    %v447 = vpop.f32.mrf.mxu0
    %v448 = vadd.f32 0.0, %v447
    %v449 = vpop.f32.mrf.mxu0
    %v450 = vadd.f32 0.0, %v449
    %v451 = vpop.f32.mrf.mxu0
    %v452 = vadd.f32 0.0, %v451
    %v453 = vpop.f32.mrf.mxu0
    %v454 = vadd.f32 0.0, %v453
    %455 = vdwg.mxu0
    %v456 = vadd.f32 %v378, %v382
    %v457 = vadd.f32 %v456, %v388
    %v458 = vadd.f32 %v457, %v392
    %v459 = vadd.f32 %v458, %v398
    %v460 = vadd.f32 %v459, %v402
    %v461 = vadd.f32 %v460, %v408
    %v462 = vadd.f32 %v461, %v412
    %v463 = vadd.f32 %v462, %v418
    %v464 = vadd.f32 %v463, %v422
    %v465 = vadd.f32 %v464, %v428
    %v466 = vadd.f32 %v465, %v432
    %v467 = vadd.f32 %v466, %v438
    %v468 = vadd.f32 %v467, %v442
    %v469 = vadd.f32 %v468, %v448
    %v470 = vadd.f32 %v469, %v452
    %v471 = vrot.slane %v470, 4
    %v472 = vadd.f32 %v470, %v471
    %v473 = vrot.slane %v472, 2
    %v474 = vadd.f32 %v472, %v473
    %v475 = vrot.slane %v474, 1
    %v476 = vadd.f32 %v474, %v475
    %v477 = vadd.f32 %v380, %v384
    %v478 = vadd.f32 %v477, %v390
    %v479 = vadd.f32 %v478, %v394
    %v480 = vadd.f32 %v479, %v400
    %v481 = vadd.f32 %v480, %v404
    %v482 = vadd.f32 %v481, %v410
    %v483 = vadd.f32 %v482, %v414
    %v484 = vadd.f32 %v483, %v420
    %v485 = vadd.f32 %v484, %v424
    %v486 = vadd.f32 %v485, %v430
    %v487 = vadd.f32 %v486, %v434
    %v488 = vadd.f32 %v487, %v440
    %v489 = vadd.f32 %v488, %v444
    %v490 = vadd.f32 %v489, %v450
    %v491 = vadd.f32 %v490, %v454
    %v492 = vrot.slane %v491, 4
    %v493 = vadd.f32 %v491, %v492
    %v494 = vrot.slane %v493, 2
    %v495 = vadd.f32 %v493, %v494
    %v496 = vrot.slane %v495, 1
    %v497 = vadd.f32 %v495, %v496
    %v498 = vrcp.pop 128.0
    %v499 = vmul.f32 %v476, %v498
    %v500 = vmul.f32 %v497, %v498
    %v501 = vmul.f32 %v378, %v378
    %v502 = vmul.f32 %v380, %v380
    %v503 = vmul.f32 %v382, %v382
    %v504 = vmul.f32 %v384, %v384
    %v505 = vmul.f32 %v388, %v388
    %v506 = vmul.f32 %v390, %v390
    %v507 = vmul.f32 %v392, %v392
    %v508 = vmul.f32 %v394, %v394
    %v509 = vmul.f32 %v398, %v398
    %v510 = vmul.f32 %v400, %v400
    %v511 = vmul.f32 %v402, %v402
    %v512 = vmul.f32 %v404, %v404
    %v513 = vmul.f32 %v408, %v408
    %v514 = vmul.f32 %v410, %v410
    %v515 = vmul.f32 %v412, %v412
    %v516 = vmul.f32 %v414, %v414
    %v517 = vmul.f32 %v418, %v418
    %v518 = vmul.f32 %v420, %v420
    %v519 = vmul.f32 %v422, %v422
    %v520 = vmul.f32 %v424, %v424
    %v521 = vmul.f32 %v428, %v428
    %v522 = vmul.f32 %v430, %v430
    %v523 = vmul.f32 %v432, %v432
    %v524 = vmul.f32 %v434, %v434
    %v525 = vmul.f32 %v438, %v438
    %v526 = vmul.f32 %v440, %v440
    %v527 = vmul.f32 %v442, %v442
    %v528 = vmul.f32 %v444, %v444
    %v529 = vmul.f32 %v448, %v448
    %v530 = vmul.f32 %v450, %v450
    %v531 = vmul.f32 %v452, %v452
    %v532 = vmul.f32 %v454, %v454
    %v533 = vadd.f32 %v501, %v503
    %v534 = vadd.f32 %v533, %v505
    %v535 = vadd.f32 %v534, %v507
    %v536 = vadd.f32 %v535, %v509
    %v537 = vadd.f32 %v536, %v511
    %v538 = vadd.f32 %v537, %v513
    %v539 = vadd.f32 %v538, %v515
    %v540 = vadd.f32 %v539, %v517
    %v541 = vadd.f32 %v540, %v519
    %v542 = vadd.f32 %v541, %v521
    %v543 = vadd.f32 %v542, %v523
    %v544 = vadd.f32 %v543, %v525
    %v545 = vadd.f32 %v544, %v527
    %v546 = vadd.f32 %v545, %v529
    %v547 = vadd.f32 %v546, %v531
    %v548 = vrot.slane %v547, 4
    %v549 = vadd.f32 %v547, %v548
    %v550 = vrot.slane %v549, 2
    %v551 = vadd.f32 %v549, %v550
    %v552 = vrot.slane %v551, 1
    %v553 = vadd.f32 %v551, %v552
    %v554 = vadd.f32 %v502, %v504
    %v555 = vadd.f32 %v554, %v506
    %v556 = vadd.f32 %v555, %v508
    %v557 = vadd.f32 %v556, %v510
    %v558 = vadd.f32 %v557, %v512
    %v559 = vadd.f32 %v558, %v514
    %v560 = vadd.f32 %v559, %v516
    %v561 = vadd.f32 %v560, %v518
    %v562 = vadd.f32 %v561, %v520
    %v563 = vadd.f32 %v562, %v522
    %v564 = vadd.f32 %v563, %v524
    %v565 = vadd.f32 %v564, %v526
    %v566 = vadd.f32 %v565, %v528
    %v567 = vadd.f32 %v566, %v530
    %v568 = vadd.f32 %v567, %v532
    %v569 = vrot.slane %v568, 4
    %v570 = vadd.f32 %v568, %v569
    %v571 = vrot.slane %v570, 2
    %v572 = vadd.f32 %v570, %v571
    %v573 = vrot.slane %v572, 1
    %v574 = vadd.f32 %v572, %v573
    %v575 = vmul.f32 %v553, %v498
    %v576 = vmul.f32 %v574, %v498
    %v577 = vmul.f32 %v499, %v499
    %v578 = vmul.f32 %v500, %v500
    %v579 = vsub.f32 %v575, %v577
    %v580 = vsub.f32 %v576, %v578
    %v581 = vadd.f32 %v579, 1e-05
    %v582 = vadd.f32 %v580, 1e-05
    %v583 = vrsqrt.pop %v581
    %v584 = vrsqrt.pop %v582
    %v587 = vcombine.low %v583, %v584
    %v589 = vunpack.c.l.s4 1966171168
    %v590 = vunpack.c.0.s8 %v589
    %v591 = vlaneseq
    %v592 = vshrl.u32 %v591, 7
    %v593 = vsub.s32 %v590, %v592
    %v594 = vrot.slane %v587, %v593
    %v596 = vunpack.c.l.s4 1966171168
    %v597 = vunpack.c.0.s8 %v596
    %v598 = vlaneseq
    %v599 = vshrl.u32 %v598, 7
    %v600 = vsub.s32 %v597, %v599
    %v601 = vrot.slane %v594, %v600
    %v603 = vmul.f32 %v44, %v601
    %v605 = vlaneseq
    %v606 = vshrl.u32 %v605, 7
    %v607 = vsub.s32 0, %v606
    %v608 = vrot.slane %v603, %v607
    %v609 = vlaneseq
    %v610 = vshrl.u32 %v609, 7
    %v611 = vsub.s32 1, %v610
    %v612 = vrot.slane %v603, %v611
    %v615 = vmul.f32 %v499, %v608
    %v616 = vmul.f32 %v500, %v612
    %v619 = vcombine.low %v615, %v616
    %v621 = vunpack.c.l.s4 1966171168
    %v622 = vunpack.c.0.s8 %v621
    %v623 = vlaneseq
    %v624 = vshrl.u32 %v623, 7
    %v625 = vsub.s32 %v622, %v624
    %v626 = vrot.slane %v619, %v625
    %v628 = vunpack.c.l.s4 1966171168
    %v629 = vunpack.c.0.s8 %v628
    %v630 = vlaneseq
    %v631 = vshrl.u32 %v630, 7
    %v632 = vsub.s32 %v629, %v631
    %v633 = vrot.slane %v626, %v632
    %v635 = vsub.f32 %v46, %v633
    %v636 = vmul.f32 %v378, %v608
    %v637 = vmul.f32 %v380, %v612
    %v638 = vmul.f32 %v382, %v608
    %v639 = vmul.f32 %v384, %v612
    %v640 = vmul.f32 %v388, %v608
    %v641 = vmul.f32 %v390, %v612
    %v642 = vmul.f32 %v392, %v608
    %v643 = vmul.f32 %v394, %v612
    %v644 = vmul.f32 %v398, %v608
    %v645 = vmul.f32 %v400, %v612
    %v646 = vmul.f32 %v402, %v608
    %v647 = vmul.f32 %v404, %v612
    %v648 = vmul.f32 %v408, %v608
    %v649 = vmul.f32 %v410, %v612
    %v650 = vmul.f32 %v412, %v608
    %v651 = vmul.f32 %v414, %v612
    %v652 = vmul.f32 %v418, %v608
    %v653 = vmul.f32 %v420, %v612
    %v654 = vmul.f32 %v422, %v608
    %v655 = vmul.f32 %v424, %v612
    %v656 = vmul.f32 %v428, %v608
    %v657 = vmul.f32 %v430, %v612
    %v658 = vmul.f32 %v432, %v608
    %v659 = vmul.f32 %v434, %v612
    %v660 = vmul.f32 %v438, %v608
    %v661 = vmul.f32 %v440, %v612
    %v662 = vmul.f32 %v442, %v608
    %v663 = vmul.f32 %v444, %v612
    %v664 = vmul.f32 %v448, %v608
    %v665 = vmul.f32 %v450, %v612
    %v666 = vmul.f32 %v452, %v608
    %v667 = vmul.f32 %v454, %v612
    %v669 = vlaneseq
    %v670 = vshrl.u32 %v669, 7
    %v671 = vsub.s32 0, %v670
    %v672 = vrot.slane %v635, %v671
    %v673 = vlaneseq
    %v674 = vshrl.u32 %v673, 7
    %v675 = vsub.s32 1, %v674
    %v676 = vrot.slane %v635, %v675
    %v679 = vadd.f32 %v636, %v672
    %v680 = vadd.f32 %v637, %v676
    %v681 = vadd.f32 %v638, %v672
    %v682 = vadd.f32 %v639, %v676
    %v683 = vadd.f32 %v640, %v672
    %v684 = vadd.f32 %v641, %v676
    %v685 = vadd.f32 %v642, %v672
    %v686 = vadd.f32 %v643, %v676
    %v687 = vadd.f32 %v644, %v672
    %v688 = vadd.f32 %v645, %v676
    %v689 = vadd.f32 %v646, %v672
    %v690 = vadd.f32 %v647, %v676
    %v691 = vadd.f32 %v648, %v672
    %v692 = vadd.f32 %v649, %v676
    %v693 = vadd.f32 %v650, %v672
    %v694 = vadd.f32 %v651, %v676
    %v695 = vadd.f32 %v652, %v672
    %v696 = vadd.f32 %v653, %v676
    %v697 = vadd.f32 %v654, %v672
    %v698 = vadd.f32 %v655, %v676
    %v699 = vadd.f32 %v656, %v672
    %v700 = vadd.f32 %v657, %v676
    %v701 = vadd.f32 %v658, %v672
    %v702 = vadd.f32 %v659, %v676
    %v703 = vadd.f32 %v660, %v672
    %v704 = vadd.f32 %v661, %v676
    %v705 = vadd.f32 %v662, %v672
    %v706 = vadd.f32 %v663, %v676
    %v707 = vadd.f32 %v664, %v672
    %v708 = vadd.f32 %v665, %v676
    %v709 = vadd.f32 %v666, %v672
    %v710 = vadd.f32 %v667, %v676
    %vm711 = vcmp.ge.f32.partialorder %v679, 0.0
    %vm712 = vcmp.ge.f32.partialorder %v680, 0.0
    %vm713 = vcmp.ge.f32.partialorder %v681, 0.0
    %vm714 = vcmp.ge.f32.partialorder %v682, 0.0
    %vm715 = vcmp.ge.f32.partialorder %v683, 0.0
    %vm716 = vcmp.ge.f32.partialorder %v684, 0.0
    %vm717 = vcmp.ge.f32.partialorder %v685, 0.0
    %vm718 = vcmp.ge.f32.partialorder %v686, 0.0
    %vm719 = vcmp.ge.f32.partialorder %v687, 0.0
    %vm720 = vcmp.ge.f32.partialorder %v688, 0.0
    %vm721 = vcmp.ge.f32.partialorder %v689, 0.0
    %vm722 = vcmp.ge.f32.partialorder %v690, 0.0
    %vm723 = vcmp.ge.f32.partialorder %v691, 0.0
    %vm724 = vcmp.ge.f32.partialorder %v692, 0.0
    %vm725 = vcmp.ge.f32.partialorder %v693, 0.0
    %vm726 = vcmp.ge.f32.partialorder %v694, 0.0
    %vm727 = vcmp.ge.f32.partialorder %v695, 0.0
    %vm728 = vcmp.ge.f32.partialorder %v696, 0.0
    %vm729 = vcmp.ge.f32.partialorder %v697, 0.0
    %vm730 = vcmp.ge.f32.partialorder %v698, 0.0
    %vm731 = vcmp.ge.f32.partialorder %v699, 0.0
    %vm732 = vcmp.ge.f32.partialorder %v700, 0.0
    %vm733 = vcmp.ge.f32.partialorder %v701, 0.0
    %vm734 = vcmp.ge.f32.partialorder %v702, 0.0
    %vm735 = vcmp.ge.f32.partialorder %v703, 0.0
    %vm736 = vcmp.ge.f32.partialorder %v704, 0.0
    %vm737 = vcmp.ge.f32.partialorder %v705, 0.0
    %vm738 = vcmp.ge.f32.partialorder %v706, 0.0
    %vm739 = vcmp.ge.f32.partialorder %v707, 0.0
    %vm740 = vcmp.ge.f32.partialorder %v708, 0.0
    %vm741 = vcmp.ge.f32.partialorder %v709, 0.0
    %vm742 = vcmp.ge.f32.partialorder %v710, 0.0
    %v743 = vmul.f32 %v679, 0.01
    %v744 = vmul.f32 %v680, 0.01
    %v745 = vmul.f32 %v681, 0.01
    %v746 = vmul.f32 %v682, 0.01
    %v747 = vmul.f32 %v683, 0.01
    %v748 = vmul.f32 %v684, 0.01
    %v749 = vmul.f32 %v685, 0.01
    %v750 = vmul.f32 %v686, 0.01
    %v751 = vmul.f32 %v687, 0.01
    %v752 = vmul.f32 %v688, 0.01
    %v753 = vmul.f32 %v689, 0.01
    %v754 = vmul.f32 %v690, 0.01
    %v755 = vmul.f32 %v691, 0.01
    %v756 = vmul.f32 %v692, 0.01
    %v757 = vmul.f32 %v693, 0.01
    %v758 = vmul.f32 %v694, 0.01
    %v759 = vmul.f32 %v695, 0.01
    %v760 = vmul.f32 %v696, 0.01
    %v761 = vmul.f32 %v697, 0.01
    %v762 = vmul.f32 %v698, 0.01
    %v763 = vmul.f32 %v699, 0.01
    %v764 = vmul.f32 %v700, 0.01
    %v765 = vmul.f32 %v701, 0.01
    %v766 = vmul.f32 %v702, 0.01
    %v767 = vmul.f32 %v703, 0.01
    %v768 = vmul.f32 %v704, 0.01
    %v769 = vmul.f32 %v705, 0.01
    %v770 = vmul.f32 %v706, 0.01
    %v771 = vmul.f32 %v707, 0.01
    %v772 = vmul.f32 %v708, 0.01
    %v773 = vmul.f32 %v709, 0.01
    %v774 = vmul.f32 %v710, 0.01
    %v775 = vsel %vm711, %v679, %v743
    %v776 = vsel %vm712, %v680, %v744
    %v777 = vsel %vm713, %v681, %v745
    %v778 = vsel %vm714, %v682, %v746
    %v779 = vsel %vm715, %v683, %v747
    %v780 = vsel %vm716, %v684, %v748
    %v781 = vsel %vm717, %v685, %v749
    %v782 = vsel %vm718, %v686, %v750
    %v783 = vsel %vm719, %v687, %v751
    %v784 = vsel %vm720, %v688, %v752
    %v785 = vsel %vm721, %v689, %v753
    %v786 = vsel %vm722, %v690, %v754
    %v787 = vsel %vm723, %v691, %v755
    %v788 = vsel %vm724, %v692, %v756
    %v789 = vsel %vm725, %v693, %v757
    %v790 = vsel %vm726, %v694, %v758
    %v791 = vsel %vm727, %v695, %v759
    %v792 = vsel %vm728, %v696, %v760
    %v793 = vsel %vm729, %v697, %v761
    %v794 = vsel %vm730, %v698, %v762
    %v795 = vsel %vm731, %v699, %v763
    %v796 = vsel %vm732, %v700, %v764
    %v797 = vsel %vm733, %v701, %v765
    %v798 = vsel %vm734, %v702, %v766
    %v799 = vsel %vm735, %v703, %v767
    %v800 = vsel %vm736, %v704, %v768
    %v801 = vsel %vm737, %v705, %v769
    %v802 = vsel %vm738, %v706, %v770
    %v803 = vsel %vm739, %v707, %v771
    %v804 = vsel %vm740, %v708, %v772
    %v805 = vsel %vm741, %v709, %v773
    %v806 = vsel %vm742, %v710, %v774
    %v807 = vpack.c.bf16 %v777, %v775
    %v808 = vpack.c.bf16 %v778, %v776
    %v809 = vpack.c.bf16 %v781, %v779
    %v810 = vpack.c.bf16 %v782, %v780
    %v811 = vpack.c.bf16 %v785, %v783
    %v812 = vpack.c.bf16 %v786, %v784
    %v813 = vpack.c.bf16 %v789, %v787
    %v814 = vpack.c.bf16 %v790, %v788
    %v815 = vpack.c.bf16 %v793, %v791
    %v816 = vpack.c.bf16 %v794, %v792
    %v817 = vpack.c.bf16 %v797, %v795
    %v818 = vpack.c.bf16 %v798, %v796
    %v819 = vpack.c.bf16 %v801, %v799
    %v820 = vpack.c.bf16 %v802, %v800
    %v821 = vpack.c.bf16 %v805, %v803
    %v822 = vpack.c.bf16 %v806, %v804
    %v823 = vld [vmem:[%s3] sm:$0xff]
    %v824 = vld [vmem:[%s3 + $0x8] sm:$0xff]
    %v825 = vld [vmem:[%s3 + $0x10] sm:$0xff]
    %v826 = vld [vmem:[%s3 + $0x18] sm:$0xff]
    %v827 = vld [vmem:[%s3 + $0x20] sm:$0xff]
    %v828 = vld [vmem:[%s3 + $0x28] sm:$0xff]
    %v829 = vld [vmem:[%s3 + $0x30] sm:$0xff]
    %v830 = vld [vmem:[%s3 + $0x38] sm:$0xff]
    %v831 = vld [vmem:[%s3 + $0x40] sm:$0xff]
    %v832 = vld [vmem:[%s3 + $0x48] sm:$0xff]
    %v833 = vld [vmem:[%s3 + $0x50] sm:$0xff]
    %v834 = vld [vmem:[%s3 + $0x58] sm:$0xff]
    %v835 = vld [vmem:[%s3 + $0x60] sm:$0xff]
    %v836 = vld [vmem:[%s3 + $0x68] sm:$0xff]
    %v837 = vld [vmem:[%s3 + $0x70] sm:$0xff]
    %v838 = vld [vmem:[%s3 + $0x78] sm:$0xff]
    %v839 = vld [vmem:[%s3 + $0x80] sm:$0xff]
    %v840 = vld [vmem:[%s3 + $0x88] sm:$0xff]
    %v841 = vld [vmem:[%s3 + $0x90] sm:$0xff]
    %v842 = vld [vmem:[%s3 + $0x98] sm:$0xff]
    %v843 = vld [vmem:[%s3 + $0xa0] sm:$0xff]
    %v844 = vld [vmem:[%s3 + $0xa8] sm:$0xff]
    %v845 = vld [vmem:[%s3 + $0xb0] sm:$0xff]
    %v846 = vld [vmem:[%s3 + $0xb8] sm:$0xff]
    %v847 = vld [vmem:[%s3 + $0xc0] sm:$0xff]
    %v848 = vld [vmem:[%s3 + $0xc8] sm:$0xff]
    %v849 = vld [vmem:[%s3 + $0xd0] sm:$0xff]
    %v850 = vld [vmem:[%s3 + $0xd8] sm:$0xff]
    %v851 = vld [vmem:[%s3 + $0xe0] sm:$0xff]
    %v852 = vld [vmem:[%s3 + $0xe8] sm:$0xff]
    %v853 = vld [vmem:[%s3 + $0xf0] sm:$0xff]
    %v854 = vld [vmem:[%s3 + $0xf8] sm:$0xff]
    %v856 = vlaneseq
    %v857 = vshrl.u32 %v856, 7
    %v858 = vsub.s32 0, %v857
    %v859 = vrot.slane %v48, %v858
    %v860 = vlaneseq
    %v861 = vshrl.u32 %v860, 7
    %v862 = vsub.s32 1, %v861
    %v863 = vrot.slane %v48, %v862
    %v898 = vunpack.c.l.b16 %v823
    %v899 = vunpack.c.h.b16 %v823
    %v900 = vunpack.c.l.b16 %v824
    %v901 = vunpack.c.h.b16 %v824
    %v902 = vunpack.c.l.b16 %v825
    %v903 = vunpack.c.h.b16 %v825
    %v904 = vunpack.c.l.b16 %v826
    %v905 = vunpack.c.h.b16 %v826
    %v906 = vunpack.c.l.b16 %v827
    %v907 = vunpack.c.h.b16 %v827
    %v908 = vunpack.c.l.b16 %v828
    %v909 = vunpack.c.h.b16 %v828
    %v910 = vunpack.c.l.b16 %v829
    %v911 = vunpack.c.h.b16 %v829
    %v912 = vunpack.c.l.b16 %v830
    %v913 = vunpack.c.h.b16 %v830
    %v914 = vunpack.c.l.b16 %v831
    %v915 = vunpack.c.h.b16 %v831
    %v916 = vunpack.c.l.b16 %v832
    %v917 = vunpack.c.h.b16 %v832
    %v918 = vunpack.c.l.b16 %v833
    %v919 = vunpack.c.h.b16 %v833
    %v920 = vunpack.c.l.b16 %v834
    %v921 = vunpack.c.h.b16 %v834
    %v922 = vunpack.c.l.b16 %v835
    %v923 = vunpack.c.h.b16 %v835
    %v924 = vunpack.c.l.b16 %v836
    %v925 = vunpack.c.h.b16 %v836
    %v926 = vunpack.c.l.b16 %v837
    %v927 = vunpack.c.h.b16 %v837
    %v928 = vunpack.c.l.b16 %v838
    %v929 = vunpack.c.h.b16 %v838
    %v930 = vunpack.c.l.b16 %v839
    %v931 = vunpack.c.h.b16 %v839
    %v932 = vunpack.c.l.b16 %v840
    %v933 = vunpack.c.h.b16 %v840
    %v934 = vunpack.c.l.b16 %v841
    %v935 = vunpack.c.h.b16 %v841
    %v936 = vunpack.c.l.b16 %v842
    %v937 = vunpack.c.h.b16 %v842
    %v938 = vunpack.c.l.b16 %v843
    %v939 = vunpack.c.h.b16 %v843
    %v940 = vunpack.c.l.b16 %v844
    %v941 = vunpack.c.h.b16 %v844
    %v942 = vunpack.c.l.b16 %v845
    %v943 = vunpack.c.h.b16 %v845
    %v944 = vunpack.c.l.b16 %v846
    %v945 = vunpack.c.h.b16 %v846
    %v946 = vunpack.c.l.b16 %v847
    %v947 = vunpack.c.h.b16 %v847
    %v948 = vunpack.c.l.b16 %v848
    %v949 = vunpack.c.h.b16 %v848
    %v950 = vunpack.c.l.b16 %v849
    %v951 = vunpack.c.h.b16 %v849
    %v952 = vunpack.c.l.b16 %v850
    %v953 = vunpack.c.h.b16 %v850
    %v954 = vunpack.c.l.b16 %v851
    %v955 = vunpack.c.h.b16 %v851
    %v956 = vunpack.c.l.b16 %v852
    %v957 = vunpack.c.h.b16 %v852
    %v958 = vunpack.c.l.b16 %v853
    %v959 = vunpack.c.h.b16 %v853
    %v960 = vunpack.c.l.b16 %v854
    %v961 = vunpack.c.h.b16 %v854
    %v962 = vpack.c.b16 %v900, %v898
    %v963 = vpack.c.b16 %v901, %v899
    %v964 = vpack.c.b16 %v904, %v902
    %v965 = vpack.c.b16 %v905, %v903
    %v966 = vpack.c.b16 %v908, %v906
    %v967 = vpack.c.b16 %v909, %v907
    %v968 = vpack.c.b16 %v912, %v910
    %v969 = vpack.c.b16 %v913, %v911
    %v970 = vpack.c.b16 %v916, %v914
    %v971 = vpack.c.b16 %v917, %v915
    %v972 = vpack.c.b16 %v920, %v918
    %v973 = vpack.c.b16 %v921, %v919
    %v974 = vpack.c.b16 %v924, %v922
    %v975 = vpack.c.b16 %v925, %v923
    %v976 = vpack.c.b16 %v928, %v926
    %v977 = vpack.c.b16 %v929, %v927
    %v978 = vpack.c.b16 %v932, %v930
    %v979 = vpack.c.b16 %v933, %v931
    %v980 = vpack.c.b16 %v936, %v934
    %v981 = vpack.c.b16 %v937, %v935
    %v982 = vpack.c.b16 %v940, %v938
    %v983 = vpack.c.b16 %v941, %v939
    %v984 = vpack.c.b16 %v944, %v942
    %v985 = vpack.c.b16 %v945, %v943
    %v986 = vpack.c.b16 %v948, %v946
    %v987 = vpack.c.b16 %v949, %v947
    %v988 = vpack.c.b16 %v952, %v950
    %v989 = vpack.c.b16 %v953, %v951
    %v990 = vpack.c.b16 %v956, %v954
    %v991 = vpack.c.b16 %v957, %v955
    %v992 = vpack.c.b16 %v960, %v958
    %v993 = vpack.c.b16 %v961, %v959
    %1026 = vmatprep.subr.bf16.mxu0 %v977
    %1027 = vmatpush1.bf16.msra.mxu0 %v976
    %1028 = vmatprep.subr.bf16.mxu0 %v975
    %1029 = vmatpush1.bf16.msra.mxu0 %v974
    %1030 = vmatprep.subr.bf16.mxu0 %v973
    %1031 = vmatpush1.bf16.msra.mxu0 %v972
    %1032 = vmatprep.subr.bf16.mxu0 %v971
    %1033 = vmatpush1.bf16.msra.mxu0 %v970
    %1034 = vmatprep.subr.bf16.mxu0 %v969
    %1035 = vmatpush1.bf16.msra.mxu0 %v968
    %1036 = vmatprep.subr.bf16.mxu0 %v967
    %1037 = vmatpush1.bf16.msra.mxu0 %v966
    %1038 = vmatprep.subr.bf16.mxu0 %v965
    %1039 = vmatpush1.bf16.msra.mxu0 %v964
    %1040 = vmatprep.subr.bf16.mxu0 %v963
    %1041 = vmatpush1.bf16.msra.mxu0 %v962
    %1042 = vmatprep.subr.bf16.mxu0 %v993
    %1043 = vmatpush2.bf16.msra.mxu0 %v992
    %1044 = vmatprep.subr.bf16.mxu0 %v991
    %1045 = vmatpush2.bf16.msra.mxu0 %v990
    %1046 = vmatprep.subr.bf16.mxu0 %v989
    %1047 = vmatpush2.bf16.msra.mxu0 %v988
    %1048 = vmatprep.subr.bf16.mxu0 %v987
    %1049 = vmatpush2.bf16.msra.mxu0 %v986
    %1050 = vmatprep.subr.bf16.mxu0 %v985
    %1051 = vmatpush2.bf16.msra.mxu0 %v984
    %1052 = vmatprep.subr.bf16.mxu0 %v983
    %1053 = vmatpush2.bf16.msra.mxu0 %v982
    %1054 = vmatprep.subr.bf16.mxu0 %v981
    %1055 = vmatpush2.bf16.msra.mxu0 %v980
    %1056 = vmatprep.subr.bf16.mxu0 %v979
    %1057 = vmatpush2.bf16.msra.mxu0 %v978
    %1058 = vmatprep.mubr.bf16.mxu0 %v808
    %1059 = vmatmul.mubr.bf16.gmra.mxu0 %v807
    %v1060 = vpop.f32.mrf.mxu0
    %v1061 = vadd.f32 %v859, %v1060
    %v1062 = vpop.f32.mrf.mxu0
    %v1063 = vadd.f32 %v863, %v1062
    %v1064 = vpop.f32.mrf.mxu0
    %v1065 = vadd.f32 %v859, %v1064
    %v1066 = vpop.f32.mrf.mxu0
    %v1067 = vadd.f32 %v863, %v1066
    %1068 = vmatprep.mubr.bf16.mxu0 %v810
    %1069 = vmatmul.mubr.bf16.gmra.mxu0 %v809
    %v1070 = vpop.f32.mrf.mxu0
    %v1071 = vadd.f32 %v859, %v1070
    %v1072 = vpop.f32.mrf.mxu0
    %v1073 = vadd.f32 %v863, %v1072
    %v1074 = vpop.f32.mrf.mxu0
    %v1075 = vadd.f32 %v859, %v1074
    %v1076 = vpop.f32.mrf.mxu0
    %v1077 = vadd.f32 %v863, %v1076
    %1078 = vmatprep.mubr.bf16.mxu0 %v812
    %1079 = vmatmul.mubr.bf16.gmra.mxu0 %v811
    %v1080 = vpop.f32.mrf.mxu0
    %v1081 = vadd.f32 %v859, %v1080
    %v1082 = vpop.f32.mrf.mxu0
    %v1083 = vadd.f32 %v863, %v1082
    %v1084 = vpop.f32.mrf.mxu0
    %v1085 = vadd.f32 %v859, %v1084
    %v1086 = vpop.f32.mrf.mxu0
    %v1087 = vadd.f32 %v863, %v1086
    %1088 = vmatprep.mubr.bf16.mxu0 %v814
    %1089 = vmatmul.mubr.bf16.gmra.mxu0 %v813
    %v1090 = vpop.f32.mrf.mxu0
    %v1091 = vadd.f32 %v859, %v1090
    %v1092 = vpop.f32.mrf.mxu0
    %v1093 = vadd.f32 %v863, %v1092
    %v1094 = vpop.f32.mrf.mxu0
    %v1095 = vadd.f32 %v859, %v1094
    %v1096 = vpop.f32.mrf.mxu0
    %v1097 = vadd.f32 %v863, %v1096
    %1098 = vmatprep.mubr.bf16.mxu0 %v816
    %1099 = vmatmul.mubr.bf16.gmra.mxu0 %v815
    %v1100 = vpop.f32.mrf.mxu0
    %v1101 = vadd.f32 %v859, %v1100
    %v1102 = vpop.f32.mrf.mxu0
    %v1103 = vadd.f32 %v863, %v1102
    %v1104 = vpop.f32.mrf.mxu0
    %v1105 = vadd.f32 %v859, %v1104
    %v1106 = vpop.f32.mrf.mxu0
    %v1107 = vadd.f32 %v863, %v1106
    %1108 = vmatprep.mubr.bf16.mxu0 %v818
    %1109 = vmatmul.mubr.bf16.gmra.mxu0 %v817
    %v1110 = vpop.f32.mrf.mxu0
    %v1111 = vadd.f32 %v859, %v1110
    %v1112 = vpop.f32.mrf.mxu0
    %v1113 = vadd.f32 %v863, %v1112
    %v1114 = vpop.f32.mrf.mxu0
    %v1115 = vadd.f32 %v859, %v1114
    %v1116 = vpop.f32.mrf.mxu0
    %v1117 = vadd.f32 %v863, %v1116
    %1118 = vmatprep.mubr.bf16.mxu0 %v820
    %1119 = vmatmul.mubr.bf16.gmra.mxu0 %v819
    %v1120 = vpop.f32.mrf.mxu0
    %v1121 = vadd.f32 %v859, %v1120
    %v1122 = vpop.f32.mrf.mxu0
    %v1123 = vadd.f32 %v863, %v1122
    %v1124 = vpop.f32.mrf.mxu0
    %v1125 = vadd.f32 %v859, %v1124
    %v1126 = vpop.f32.mrf.mxu0
    %v1127 = vadd.f32 %v863, %v1126
    %1128 = vmatprep.mubr.bf16.mxu0 %v822
    %1129 = vmatmul.mubr.bf16.gmra.mxu0 %v821
    %v1130 = vpop.f32.mrf.mxu0
    %v1131 = vadd.f32 %v859, %v1130
    %v1132 = vpop.f32.mrf.mxu0
    %v1133 = vadd.f32 %v863, %v1132
    %v1134 = vpop.f32.mrf.mxu0
    %v1135 = vadd.f32 %v859, %v1134
    %v1136 = vpop.f32.mrf.mxu0
    %v1137 = vadd.f32 %v863, %v1136
    %1138 = vdwg.mxu0
    %v1139 = vld [vmem:[%s1] sm:$0xff]
    %v1140 = vld [vmem:[%s1 + $0x8] sm:$0xff]
    %v1141 = vld [vmem:[%s1 + $0x10] sm:$0xff]
    %v1142 = vld [vmem:[%s1 + $0x18] sm:$0xff]
    %v1143 = vld [vmem:[%s1 + $0x20] sm:$0xff]
    %v1144 = vld [vmem:[%s1 + $0x28] sm:$0xff]
    %v1145 = vld [vmem:[%s1 + $0x30] sm:$0xff]
    %v1146 = vld [vmem:[%s1 + $0x38] sm:$0xff]
    %v1147 = vld [vmem:[%s1 + $0x40] sm:$0xff]
    %v1148 = vld [vmem:[%s1 + $0x48] sm:$0xff]
    %v1149 = vld [vmem:[%s1 + $0x50] sm:$0xff]
    %v1150 = vld [vmem:[%s1 + $0x58] sm:$0xff]
    %v1151 = vld [vmem:[%s1 + $0x60] sm:$0xff]
    %v1152 = vld [vmem:[%s1 + $0x68] sm:$0xff]
    %v1153 = vld [vmem:[%s1 + $0x70] sm:$0xff]
    %v1154 = vld [vmem:[%s1 + $0x78] sm:$0xff]
    %v1155 = vmul.f32 %v1063, 0.5
    %v1156 = vmul.f32 %v1067, 0.5
    %v1157 = vmul.f32 %v1073, 0.5
    %v1158 = vmul.f32 %v1077, 0.5
    %v1159 = vmul.f32 %v1083, 0.5
    %v1160 = vmul.f32 %v1087, 0.5
    %v1161 = vmul.f32 %v1093, 0.5
    %v1162 = vmul.f32 %v1097, 0.5
    %v1163 = vmul.f32 %v1103, 0.5
    %v1164 = vmul.f32 %v1107, 0.5
    %v1165 = vmul.f32 %v1113, 0.5
    %v1166 = vmul.f32 %v1117, 0.5
    %v1167 = vmul.f32 %v1123, 0.5
    %v1168 = vmul.f32 %v1127, 0.5
    %v1169 = vmul.f32 %v1133, 0.5
    %v1170 = vmul.f32 %v1137, 0.5
    %v1171 = vmul.f32 %v1155, 1.442695
    %v1172 = vpow.pop %v1171
    %v1173 = vmul.f32 %v1156, 1.442695
    %v1174 = vpow.pop %v1173
    %v1175 = vmul.f32 %v1157, 1.442695
    %v1176 = vpow.pop %v1175
    %v1177 = vmul.f32 %v1158, 1.442695
    %v1178 = vpow.pop %v1177
    %v1179 = vmul.f32 %v1159, 1.442695
    %v1180 = vpow.pop %v1179
    %v1181 = vmul.f32 %v1160, 1.442695
    %v1182 = vpow.pop %v1181
    %v1183 = vmul.f32 %v1161, 1.442695
    %v1184 = vpow.pop %v1183
    %v1185 = vmul.f32 %v1162, 1.442695
    %v1186 = vpow.pop %v1185
    %v1187 = vmul.f32 %v1163, 1.442695
    %v1188 = vpow.pop %v1187
    %v1189 = vmul.f32 %v1164, 1.442695
    %v1190 = vpow.pop %v1189
    %v1191 = vmul.f32 %v1165, 1.442695
    %v1192 = vpow.pop %v1191
    %v1193 = vmul.f32 %v1166, 1.442695
    %v1194 = vpow.pop %v1193
    %v1195 = vmul.f32 %v1167, 1.442695
    %v1196 = vpow.pop %v1195
    %v1197 = vmul.f32 %v1168, 1.442695
    %v1198 = vpow.pop %v1197
    %v1199 = vmul.f32 %v1169, 1.442695
    %v1200 = vpow.pop %v1199
    %v1201 = vmul.f32 %v1170, 1.442695
    %v1202 = vpow.pop %v1201
    %v1203 = vmul.f32 %v1139, %v1172
    %v1204 = vmul.f32 %v1140, %v1174
    %v1205 = vmul.f32 %v1141, %v1176
    %v1206 = vmul.f32 %v1142, %v1178
    %v1207 = vmul.f32 %v1143, %v1180
    %v1208 = vmul.f32 %v1144, %v1182
    %v1209 = vmul.f32 %v1145, %v1184
    %v1210 = vmul.f32 %v1146, %v1186
    %v1211 = vmul.f32 %v1147, %v1188
    %v1212 = vmul.f32 %v1148, %v1190
    %v1213 = vmul.f32 %v1149, %v1192
    %v1214 = vmul.f32 %v1150, %v1194
    %v1215 = vmul.f32 %v1151, %v1196
    %v1216 = vmul.f32 %v1152, %v1198
    %v1217 = vmul.f32 %v1153, %v1200
    %v1218 = vmul.f32 %v1154, %v1202
    %v1219 = vadd.f32 %v1061, %v1203
    %v1220 = vadd.f32 %v1065, %v1204
    %v1221 = vadd.f32 %v1071, %v1205
    %v1222 = vadd.f32 %v1075, %v1206
    %v1223 = vadd.f32 %v1081, %v1207
    %v1224 = vadd.f32 %v1085, %v1208
    %v1225 = vadd.f32 %v1091, %v1209
    %v1226 = vadd.f32 %v1095, %v1210
    %v1227 = vadd.f32 %v1101, %v1211
    %v1228 = vadd.f32 %v1105, %v1212
    %v1229 = vadd.f32 %v1111, %v1213
    %v1230 = vadd.f32 %v1115, %v1214
    %v1231 = vadd.f32 %v1121, %v1215
    %v1232 = vadd.f32 %v1125, %v1216
    %v1233 = vadd.f32 %v1131, %v1217
    %v1234 = vadd.f32 %v1135, %v1218
    %v1235 = vpack.c.bf16 %v1220, %v1219
    %v1236 = vpack.c.bf16 %v1222, %v1221
    %v1237 = vpack.c.bf16 %v1224, %v1223
    %v1238 = vpack.c.bf16 %v1226, %v1225
    %v1239 = vpack.c.bf16 %v1228, %v1227
    %v1240 = vpack.c.bf16 %v1230, %v1229
    %v1241 = vpack.c.bf16 %v1232, %v1231
    %v1242 = vpack.c.bf16 %v1234, %v1233
    %v1243 = vld [vmem:[#allocation2] sm:$0xff]
    %v1244 = vld [vmem:[#allocation2 + $0x8] sm:$0xff]
    %v1245 = vld [vmem:[#allocation2 + $0x10] sm:$0xff]
    %v1246 = vld [vmem:[#allocation2 + $0x18] sm:$0xff]
    %v1247 = vld [vmem:[#allocation2 + $0x20] sm:$0xff]
    %v1248 = vld [vmem:[#allocation2 + $0x28] sm:$0xff]
    %v1249 = vld [vmem:[#allocation2 + $0x30] sm:$0xff]
    %v1250 = vld [vmem:[#allocation2 + $0x38] sm:$0xff]
    %v1251 = vld [vmem:[#allocation2 + $0x40] sm:$0xff]
    %v1252 = vld [vmem:[#allocation2 + $0x48] sm:$0xff]
    %v1253 = vld [vmem:[#allocation2 + $0x50] sm:$0xff]
    %v1254 = vld [vmem:[#allocation2 + $0x58] sm:$0xff]
    %v1255 = vld [vmem:[#allocation2 + $0x60] sm:$0xff]
    %v1256 = vld [vmem:[#allocation2 + $0x68] sm:$0xff]
    %v1257 = vld [vmem:[#allocation2 + $0x70] sm:$0xff]
    %v1258 = vld [vmem:[#allocation2 + $0x78] sm:$0xff]
    %v1275 = vunpack.c.l.b16 %v1243
    %v1276 = vunpack.c.h.b16 %v1243
    %v1277 = vunpack.c.l.b16 %v1244
    %v1278 = vunpack.c.h.b16 %v1244
    %v1279 = vunpack.c.l.b16 %v1245
    %v1280 = vunpack.c.h.b16 %v1245
    %v1281 = vunpack.c.l.b16 %v1246
    %v1282 = vunpack.c.h.b16 %v1246
    %v1283 = vunpack.c.l.b16 %v1247
    %v1284 = vunpack.c.h.b16 %v1247
    %v1285 = vunpack.c.l.b16 %v1248
    %v1286 = vunpack.c.h.b16 %v1248
    %v1287 = vunpack.c.l.b16 %v1249
    %v1288 = vunpack.c.h.b16 %v1249
    %v1289 = vunpack.c.l.b16 %v1250
    %v1290 = vunpack.c.h.b16 %v1250
    %v1291 = vunpack.c.l.b16 %v1251
    %v1292 = vunpack.c.h.b16 %v1251
    %v1293 = vunpack.c.l.b16 %v1252
    %v1294 = vunpack.c.h.b16 %v1252
    %v1295 = vunpack.c.l.b16 %v1253
    %v1296 = vunpack.c.h.b16 %v1253
    %v1297 = vunpack.c.l.b16 %v1254
    %v1298 = vunpack.c.h.b16 %v1254
    %v1299 = vunpack.c.l.b16 %v1255
    %v1300 = vunpack.c.h.b16 %v1255
    %v1301 = vunpack.c.l.b16 %v1256
    %v1302 = vunpack.c.h.b16 %v1256
    %v1303 = vunpack.c.l.b16 %v1257
    %v1304 = vunpack.c.h.b16 %v1257
    %v1305 = vunpack.c.l.b16 %v1258
    %v1306 = vunpack.c.h.b16 %v1258
    %v1307 = vpack.c.b16 %v1277, %v1275
    %v1308 = vpack.c.b16 %v1278, %v1276
    %v1309 = vpack.c.b16 %v1281, %v1279
    %v1310 = vpack.c.b16 %v1282, %v1280
    %v1311 = vpack.c.b16 %v1285, %v1283
    %v1312 = vpack.c.b16 %v1286, %v1284
    %v1313 = vpack.c.b16 %v1289, %v1287
    %v1314 = vpack.c.b16 %v1290, %v1288
    %v1315 = vpack.c.b16 %v1293, %v1291
    %v1316 = vpack.c.b16 %v1294, %v1292
    %v1317 = vpack.c.b16 %v1297, %v1295
    %v1318 = vpack.c.b16 %v1298, %v1296
    %v1319 = vpack.c.b16 %v1301, %v1299
    %v1320 = vpack.c.b16 %v1302, %v1300
    %v1321 = vpack.c.b16 %v1305, %v1303
    %v1322 = vpack.c.b16 %v1306, %v1304
    %1339 = vmatprep.subr.bf16.mxu0 %v1322
    %1340 = vmatpush1.bf16.msra.mxu0 %v1321
    %1341 = vmatprep.subr.bf16.mxu0 %v1320
    %1342 = vmatpush1.bf16.msra.mxu0 %v1319
    %1343 = vmatprep.subr.bf16.mxu0 %v1318
    %1344 = vmatpush1.bf16.msra.mxu0 %v1317
    %1345 = vmatprep.subr.bf16.mxu0 %v1316
    %1346 = vmatpush1.bf16.msra.mxu0 %v1315
    %1347 = vmatprep.subr.bf16.mxu0 %v1314
    %1348 = vmatpush1.bf16.msra.mxu0 %v1313
    %1349 = vmatprep.subr.bf16.mxu0 %v1312
    %1350 = vmatpush1.bf16.msra.mxu0 %v1311
    %1351 = vmatprep.subr.bf16.mxu0 %v1310
    %1352 = vmatpush1.bf16.msra.mxu0 %v1309
    %1353 = vmatprep.subr.bf16.mxu0 %v1308
    %1354 = vmatpush1.bf16.msra.mxu0 %v1307
    %1355 = vmatprep.subr.bf16.mxu0 0
    %1356 = vmatpush2.bf16.msra.mxu0 0
    %1357 = vmatprep.subr.bf16.mxu0 0
    %1358 = vmatpush2.bf16.msra.mxu0 0
    %1359 = vmatprep.subr.bf16.mxu0 0
    %1360 = vmatpush2.bf16.msra.mxu0 0
    %1361 = vmatprep.subr.bf16.mxu0 0
    %1362 = vmatpush2.bf16.msra.mxu0 0
    %1363 = vmatprep.subr.bf16.mxu0 0
    %1364 = vmatpush2.bf16.msra.mxu0 0
    %1365 = vmatprep.subr.bf16.mxu0 0
    %1366 = vmatpush2.bf16.msra.mxu0 0
    %1367 = vmatprep.subr.bf16.mxu0 0
    %1368 = vmatpush2.bf16.msra.mxu0 0
    %1369 = vmatprep.subr.bf16.mxu0 0
    %1370 = vmatpush2.bf16.msra.mxu0 0
    %1371 = vmatprep.mubr.bf16.mxu0 0
    %1372 = vmatmul.mubr.bf16.gmra.mxu0 %v1235
    %v1373 = vpop.f32.mrf.mxu0
    %v1374 = vadd.f32 0.0, %v1373
    %v1375 = vpop.f32.mrf.mxu0
    %v1376 = vadd.f32 0.0, %v1375
    %v1377 = vpop.f32.mrf.mxu0
    %v1378 = vadd.f32 0.0, %v1377
    %v1379 = vpop.f32.mrf.mxu0
    %v1380 = vadd.f32 0.0, %v1379
    %1381 = vmatprep.mubr.bf16.mxu0 0
    %1382 = vmatmul.mubr.bf16.gmra.mxu0 %v1236
    %v1383 = vpop.f32.mrf.mxu0
    %v1384 = vadd.f32 0.0, %v1383
    %v1385 = vpop.f32.mrf.mxu0
    %v1386 = vadd.f32 0.0, %v1385
    %v1387 = vpop.f32.mrf.mxu0
    %v1388 = vadd.f32 0.0, %v1387
    %v1389 = vpop.f32.mrf.mxu0
    %v1390 = vadd.f32 0.0, %v1389
    %1391 = vmatprep.mubr.bf16.mxu0 0
    %1392 = vmatmul.mubr.bf16.gmra.mxu0 %v1237
    %v1393 = vpop.f32.mrf.mxu0
    %v1394 = vadd.f32 0.0, %v1393
    %v1395 = vpop.f32.mrf.mxu0
    %v1396 = vadd.f32 0.0, %v1395
    %v1397 = vpop.f32.mrf.mxu0
    %v1398 = vadd.f32 0.0, %v1397
    %v1399 = vpop.f32.mrf.mxu0
    %v1400 = vadd.f32 0.0, %v1399
    %1401 = vmatprep.mubr.bf16.mxu0 0
    %1402 = vmatmul.mubr.bf16.gmra.mxu0 %v1238
    %v1403 = vpop.f32.mrf.mxu0
    %v1404 = vadd.f32 0.0, %v1403
    %v1405 = vpop.f32.mrf.mxu0
    %v1406 = vadd.f32 0.0, %v1405
    %v1407 = vpop.f32.mrf.mxu0
    %v1408 = vadd.f32 0.0, %v1407
    %v1409 = vpop.f32.mrf.mxu0
    %v1410 = vadd.f32 0.0, %v1409
    %1411 = vmatprep.mubr.bf16.mxu0 0
    %1412 = vmatmul.mubr.bf16.gmra.mxu0 %v1239
    %v1413 = vpop.f32.mrf.mxu0
    %v1414 = vadd.f32 0.0, %v1413
    %v1415 = vpop.f32.mrf.mxu0
    %v1416 = vadd.f32 0.0, %v1415
    %v1417 = vpop.f32.mrf.mxu0
    %v1418 = vadd.f32 0.0, %v1417
    %v1419 = vpop.f32.mrf.mxu0
    %v1420 = vadd.f32 0.0, %v1419
    %1421 = vmatprep.mubr.bf16.mxu0 0
    %1422 = vmatmul.mubr.bf16.gmra.mxu0 %v1240
    %v1423 = vpop.f32.mrf.mxu0
    %v1424 = vadd.f32 0.0, %v1423
    %v1425 = vpop.f32.mrf.mxu0
    %v1426 = vadd.f32 0.0, %v1425
    %v1427 = vpop.f32.mrf.mxu0
    %v1428 = vadd.f32 0.0, %v1427
    %v1429 = vpop.f32.mrf.mxu0
    %v1430 = vadd.f32 0.0, %v1429
    %1431 = vmatprep.mubr.bf16.mxu0 0
    %1432 = vmatmul.mubr.bf16.gmra.mxu0 %v1241
    %v1433 = vpop.f32.mrf.mxu0
    %v1434 = vadd.f32 0.0, %v1433
    %v1435 = vpop.f32.mrf.mxu0
    %v1436 = vadd.f32 0.0, %v1435
    %v1437 = vpop.f32.mrf.mxu0
    %v1438 = vadd.f32 0.0, %v1437
    %v1439 = vpop.f32.mrf.mxu0
    %v1440 = vadd.f32 0.0, %v1439
    %1441 = vmatprep.mubr.bf16.mxu0 0
    %1442 = vmatmul.mubr.bf16.gmra.mxu0 %v1242
    %v1443 = vpop.f32.mrf.mxu0
    %v1444 = vadd.f32 0.0, %v1443
    %v1445 = vpop.f32.mrf.mxu0
    %v1446 = vadd.f32 0.0, %v1445
    %v1447 = vpop.f32.mrf.mxu0
    %v1448 = vadd.f32 0.0, %v1447
    %v1449 = vpop.f32.mrf.mxu0
    %v1450 = vadd.f32 0.0, %v1449
    %1451 = vdwg.mxu0
    %v1452 = vadd.f32 %v1374, %v1378
    %v1453 = vadd.f32 %v1452, %v1384
    %v1454 = vadd.f32 %v1453, %v1388
    %v1455 = vadd.f32 %v1454, %v1394
    %v1456 = vadd.f32 %v1455, %v1398
    %v1457 = vadd.f32 %v1456, %v1404
    %v1458 = vadd.f32 %v1457, %v1408
    %v1459 = vadd.f32 %v1458, %v1414
    %v1460 = vadd.f32 %v1459, %v1418
    %v1461 = vadd.f32 %v1460, %v1424
    %v1462 = vadd.f32 %v1461, %v1428
    %v1463 = vadd.f32 %v1462, %v1434
    %v1464 = vadd.f32 %v1463, %v1438
    %v1465 = vadd.f32 %v1464, %v1444
    %v1466 = vadd.f32 %v1465, %v1448
    %v1467 = vrot.slane %v1466, 4
    %v1468 = vadd.f32 %v1466, %v1467
    %v1469 = vrot.slane %v1468, 2
    %v1470 = vadd.f32 %v1468, %v1469
    %v1471 = vrot.slane %v1470, 1
    %v1472 = vadd.f32 %v1470, %v1471
    %v1473 = vadd.f32 %v1376, %v1380
    %v1474 = vadd.f32 %v1473, %v1386
    %v1475 = vadd.f32 %v1474, %v1390
    %v1476 = vadd.f32 %v1475, %v1396
    %v1477 = vadd.f32 %v1476, %v1400
    %v1478 = vadd.f32 %v1477, %v1406
    %v1479 = vadd.f32 %v1478, %v1410
    %v1480 = vadd.f32 %v1479, %v1416
    %v1481 = vadd.f32 %v1480, %v1420
    %v1482 = vadd.f32 %v1481, %v1426
    %v1483 = vadd.f32 %v1482, %v1430
    %v1484 = vadd.f32 %v1483, %v1436
    %v1485 = vadd.f32 %v1484, %v1440
    %v1486 = vadd.f32 %v1485, %v1446
    %v1487 = vadd.f32 %v1486, %v1450
    %v1488 = vrot.slane %v1487, 4
    %v1489 = vadd.f32 %v1487, %v1488
    %v1490 = vrot.slane %v1489, 2
    %v1491 = vadd.f32 %v1489, %v1490
    %v1492 = vrot.slane %v1491, 1
    %v1493 = vadd.f32 %v1491, %v1492
    %v1494 = vmul.f32 %v1472, %v498
    %v1495 = vmul.f32 %v1493, %v498
    %v1496 = vmul.f32 %v1374, %v1374
    %v1497 = vmul.f32 %v1376, %v1376
    %v1498 = vmul.f32 %v1378, %v1378
    %v1499 = vmul.f32 %v1380, %v1380
    %v1500 = vmul.f32 %v1384, %v1384
    %v1501 = vmul.f32 %v1386, %v1386
    %v1502 = vmul.f32 %v1388, %v1388
    %v1503 = vmul.f32 %v1390, %v1390
    %v1504 = vmul.f32 %v1394, %v1394
    %v1505 = vmul.f32 %v1396, %v1396
    %v1506 = vmul.f32 %v1398, %v1398
    %v1507 = vmul.f32 %v1400, %v1400
    %v1508 = vmul.f32 %v1404, %v1404
    %v1509 = vmul.f32 %v1406, %v1406
    %v1510 = vmul.f32 %v1408, %v1408
    %v1511 = vmul.f32 %v1410, %v1410
    %v1512 = vmul.f32 %v1414, %v1414
    %v1513 = vmul.f32 %v1416, %v1416
    %v1514 = vmul.f32 %v1418, %v1418
    %v1515 = vmul.f32 %v1420, %v1420
    %v1516 = vmul.f32 %v1424, %v1424
    %v1517 = vmul.f32 %v1426, %v1426
    %v1518 = vmul.f32 %v1428, %v1428
    %v1519 = vmul.f32 %v1430, %v1430
    %v1520 = vmul.f32 %v1434, %v1434
    %v1521 = vmul.f32 %v1436, %v1436
    %v1522 = vmul.f32 %v1438, %v1438
    %v1523 = vmul.f32 %v1440, %v1440
    %v1524 = vmul.f32 %v1444, %v1444
    %v1525 = vmul.f32 %v1446, %v1446
    %v1526 = vmul.f32 %v1448, %v1448
    %v1527 = vmul.f32 %v1450, %v1450
    %v1528 = vadd.f32 %v1496, %v1498
    %v1529 = vadd.f32 %v1528, %v1500
    %v1530 = vadd.f32 %v1529, %v1502
    %v1531 = vadd.f32 %v1530, %v1504
    %v1532 = vadd.f32 %v1531, %v1506
    %v1533 = vadd.f32 %v1532, %v1508
    %v1534 = vadd.f32 %v1533, %v1510
    %v1535 = vadd.f32 %v1534, %v1512
    %v1536 = vadd.f32 %v1535, %v1514
    %v1537 = vadd.f32 %v1536, %v1516
    %v1538 = vadd.f32 %v1537, %v1518
    %v1539 = vadd.f32 %v1538, %v1520
    %v1540 = vadd.f32 %v1539, %v1522
    %v1541 = vadd.f32 %v1540, %v1524
    %v1542 = vadd.f32 %v1541, %v1526
    %v1543 = vrot.slane %v1542, 4
    %v1544 = vadd.f32 %v1542, %v1543
    %v1545 = vrot.slane %v1544, 2
    %v1546 = vadd.f32 %v1544, %v1545
    %v1547 = vrot.slane %v1546, 1
    %v1548 = vadd.f32 %v1546, %v1547
    %v1549 = vadd.f32 %v1497, %v1499
    %v1550 = vadd.f32 %v1549, %v1501
    %v1551 = vadd.f32 %v1550, %v1503
    %v1552 = vadd.f32 %v1551, %v1505
    %v1553 = vadd.f32 %v1552, %v1507
    %v1554 = vadd.f32 %v1553, %v1509
    %v1555 = vadd.f32 %v1554, %v1511
    %v1556 = vadd.f32 %v1555, %v1513
    %v1557 = vadd.f32 %v1556, %v1515
    %v1558 = vadd.f32 %v1557, %v1517
    %v1559 = vadd.f32 %v1558, %v1519
    %v1560 = vadd.f32 %v1559, %v1521
    %v1561 = vadd.f32 %v1560, %v1523
    %v1562 = vadd.f32 %v1561, %v1525
    %v1563 = vadd.f32 %v1562, %v1527
    %v1564 = vrot.slane %v1563, 4
    %v1565 = vadd.f32 %v1563, %v1564
    %v1566 = vrot.slane %v1565, 2
    %v1567 = vadd.f32 %v1565, %v1566
    %v1568 = vrot.slane %v1567, 1
    %v1569 = vadd.f32 %v1567, %v1568
    %v1570 = vmul.f32 %v1548, %v498
    %v1571 = vmul.f32 %v1569, %v498
    %v1572 = vmul.f32 %v1494, %v1494
    %v1573 = vmul.f32 %v1495, %v1495
    %v1574 = vsub.f32 %v1570, %v1572
    %v1575 = vsub.f32 %v1571, %v1573
    %v1576 = vadd.f32 %v1574, 1e-05
    %v1577 = vadd.f32 %v1575, 1e-05
    %v1578 = vrsqrt.pop %v1576
    %v1579 = vrsqrt.pop %v1577
    %v1582 = vcombine.low %v1578, %v1579
    %v1584 = vunpack.c.l.s4 1966171168
    %v1585 = vunpack.c.0.s8 %v1584
    %v1586 = vlaneseq
    %v1587 = vshrl.u32 %v1586, 7
    %v1588 = vsub.s32 %v1585, %v1587
    %v1589 = vrot.slane %v1582, %v1588
    %v1591 = vunpack.c.l.s4 1966171168
    %v1592 = vunpack.c.0.s8 %v1591
    %v1593 = vlaneseq
    %v1594 = vshrl.u32 %v1593, 7
    %v1595 = vsub.s32 %v1592, %v1594
    %v1596 = vrot.slane %v1589, %v1595
    %v1598 = vmul.f32 %v50, %v1596
    %v1600 = vlaneseq
    %v1601 = vshrl.u32 %v1600, 7
    %v1602 = vsub.s32 0, %v1601
    %v1603 = vrot.slane %v1598, %v1602
    %v1604 = vlaneseq
    %v1605 = vshrl.u32 %v1604, 7
    %v1606 = vsub.s32 1, %v1605
    %v1607 = vrot.slane %v1598, %v1606
    %v1610 = vmul.f32 %v1494, %v1603
    %v1611 = vmul.f32 %v1495, %v1607
    %v1614 = vcombine.low %v1610, %v1611
    %v1616 = vunpack.c.l.s4 1966171168
    %v1617 = vunpack.c.0.s8 %v1616
    %v1618 = vlaneseq
    %v1619 = vshrl.u32 %v1618, 7
    %v1620 = vsub.s32 %v1617, %v1619
    %v1621 = vrot.slane %v1614, %v1620
    %v1623 = vunpack.c.l.s4 1966171168
    %v1624 = vunpack.c.0.s8 %v1623
    %v1625 = vlaneseq
    %v1626 = vshrl.u32 %v1625, 7
    %v1627 = vsub.s32 %v1624, %v1626
    %v1628 = vrot.slane %v1621, %v1627
    %v1630 = vsub.f32 %v52, %v1628
    %v1631 = vmul.f32 %v1374, %v1603
    %v1632 = vmul.f32 %v1376, %v1607
    %v1633 = vmul.f32 %v1378, %v1603
    %v1634 = vmul.f32 %v1380, %v1607
    %v1635 = vmul.f32 %v1384, %v1603
    %v1636 = vmul.f32 %v1386, %v1607
    %v1637 = vmul.f32 %v1388, %v1603
    %v1638 = vmul.f32 %v1390, %v1607
    %v1639 = vmul.f32 %v1394, %v1603
    %v1640 = vmul.f32 %v1396, %v1607
    %v1641 = vmul.f32 %v1398, %v1603
    %v1642 = vmul.f32 %v1400, %v1607
    %v1643 = vmul.f32 %v1404, %v1603
    %v1644 = vmul.f32 %v1406, %v1607
    %v1645 = vmul.f32 %v1408, %v1603
    %v1646 = vmul.f32 %v1410, %v1607
    %v1647 = vmul.f32 %v1414, %v1603
    %v1648 = vmul.f32 %v1416, %v1607
    %v1649 = vmul.f32 %v1418, %v1603
    %v1650 = vmul.f32 %v1420, %v1607
    %v1651 = vmul.f32 %v1424, %v1603
    %v1652 = vmul.f32 %v1426, %v1607
    %v1653 = vmul.f32 %v1428, %v1603
    %v1654 = vmul.f32 %v1430, %v1607
    %v1655 = vmul.f32 %v1434, %v1603
    %v1656 = vmul.f32 %v1436, %v1607
    %v1657 = vmul.f32 %v1438, %v1603
    %v1658 = vmul.f32 %v1440, %v1607
    %v1659 = vmul.f32 %v1444, %v1603
    %v1660 = vmul.f32 %v1446, %v1607
    %v1661 = vmul.f32 %v1448, %v1603
    %v1662 = vmul.f32 %v1450, %v1607
    %v1664 = vlaneseq
    %v1665 = vshrl.u32 %v1664, 7
    %v1666 = vsub.s32 0, %v1665
    %v1667 = vrot.slane %v1630, %v1666
    %v1668 = vlaneseq
    %v1669 = vshrl.u32 %v1668, 7
    %v1670 = vsub.s32 1, %v1669
    %v1671 = vrot.slane %v1630, %v1670
    %v1674 = vadd.f32 %v1631, %v1667
    %v1675 = vadd.f32 %v1632, %v1671
    %v1676 = vadd.f32 %v1633, %v1667
    %v1677 = vadd.f32 %v1634, %v1671
    %v1678 = vadd.f32 %v1635, %v1667
    %v1679 = vadd.f32 %v1636, %v1671
    %v1680 = vadd.f32 %v1637, %v1667
    %v1681 = vadd.f32 %v1638, %v1671
    %v1682 = vadd.f32 %v1639, %v1667
    %v1683 = vadd.f32 %v1640, %v1671
    %v1684 = vadd.f32 %v1641, %v1667
    %v1685 = vadd.f32 %v1642, %v1671
    %v1686 = vadd.f32 %v1643, %v1667
    %v1687 = vadd.f32 %v1644, %v1671
    %v1688 = vadd.f32 %v1645, %v1667
    %v1689 = vadd.f32 %v1646, %v1671
    %v1690 = vadd.f32 %v1647, %v1667
    %v1691 = vadd.f32 %v1648, %v1671
    %v1692 = vadd.f32 %v1649, %v1667
    %v1693 = vadd.f32 %v1650, %v1671
    %v1694 = vadd.f32 %v1651, %v1667
    %v1695 = vadd.f32 %v1652, %v1671
    %v1696 = vadd.f32 %v1653, %v1667
    %v1697 = vadd.f32 %v1654, %v1671
    %v1698 = vadd.f32 %v1655, %v1667
    %v1699 = vadd.f32 %v1656, %v1671
    %v1700 = vadd.f32 %v1657, %v1667
    %v1701 = vadd.f32 %v1658, %v1671
    %v1702 = vadd.f32 %v1659, %v1667
    %v1703 = vadd.f32 %v1660, %v1671
    %v1704 = vadd.f32 %v1661, %v1667
    %v1705 = vadd.f32 %v1662, %v1671
    %vm1706 = vcmp.ge.f32.partialorder %v1674, 0.0
    %vm1707 = vcmp.ge.f32.partialorder %v1675, 0.0
    %vm1708 = vcmp.ge.f32.partialorder %v1676, 0.0
    %vm1709 = vcmp.ge.f32.partialorder %v1677, 0.0
    %vm1710 = vcmp.ge.f32.partialorder %v1678, 0.0
    %vm1711 = vcmp.ge.f32.partialorder %v1679, 0.0
    %vm1712 = vcmp.ge.f32.partialorder %v1680, 0.0
    %vm1713 = vcmp.ge.f32.partialorder %v1681, 0.0
    %vm1714 = vcmp.ge.f32.partialorder %v1682, 0.0
    %vm1715 = vcmp.ge.f32.partialorder %v1683, 0.0
    %vm1716 = vcmp.ge.f32.partialorder %v1684, 0.0
    %vm1717 = vcmp.ge.f32.partialorder %v1685, 0.0
    %vm1718 = vcmp.ge.f32.partialorder %v1686, 0.0
    %vm1719 = vcmp.ge.f32.partialorder %v1687, 0.0
    %vm1720 = vcmp.ge.f32.partialorder %v1688, 0.0
    %vm1721 = vcmp.ge.f32.partialorder %v1689, 0.0
    %vm1722 = vcmp.ge.f32.partialorder %v1690, 0.0
    %vm1723 = vcmp.ge.f32.partialorder %v1691, 0.0
    %vm1724 = vcmp.ge.f32.partialorder %v1692, 0.0
    %vm1725 = vcmp.ge.f32.partialorder %v1693, 0.0
    %vm1726 = vcmp.ge.f32.partialorder %v1694, 0.0
    %vm1727 = vcmp.ge.f32.partialorder %v1695, 0.0
    %vm1728 = vcmp.ge.f32.partialorder %v1696, 0.0
    %vm1729 = vcmp.ge.f32.partialorder %v1697, 0.0
    %vm1730 = vcmp.ge.f32.partialorder %v1698, 0.0
    %vm1731 = vcmp.ge.f32.partialorder %v1699, 0.0
    %vm1732 = vcmp.ge.f32.partialorder %v1700, 0.0
    %vm1733 = vcmp.ge.f32.partialorder %v1701, 0.0
    %vm1734 = vcmp.ge.f32.partialorder %v1702, 0.0
    %vm1735 = vcmp.ge.f32.partialorder %v1703, 0.0
    %vm1736 = vcmp.ge.f32.partialorder %v1704, 0.0
    %vm1737 = vcmp.ge.f32.partialorder %v1705, 0.0
    %v1738 = vmul.f32 %v1674, 0.01
    %v1739 = vmul.f32 %v1675, 0.01
    %v1740 = vmul.f32 %v1676, 0.01
    %v1741 = vmul.f32 %v1677, 0.01
    %v1742 = vmul.f32 %v1678, 0.01
    %v1743 = vmul.f32 %v1679, 0.01
    %v1744 = vmul.f32 %v1680, 0.01
    %v1745 = vmul.f32 %v1681, 0.01
    %v1746 = vmul.f32 %v1682, 0.01
    %v1747 = vmul.f32 %v1683, 0.01
    %v1748 = vmul.f32 %v1684, 0.01
    %v1749 = vmul.f32 %v1685, 0.01
    %v1750 = vmul.f32 %v1686, 0.01
    %v1751 = vmul.f32 %v1687, 0.01
    %v1752 = vmul.f32 %v1688, 0.01
    %v1753 = vmul.f32 %v1689, 0.01
    %v1754 = vmul.f32 %v1690, 0.01
    %v1755 = vmul.f32 %v1691, 0.01
    %v1756 = vmul.f32 %v1692, 0.01
    %v1757 = vmul.f32 %v1693, 0.01
    %v1758 = vmul.f32 %v1694, 0.01
    %v1759 = vmul.f32 %v1695, 0.01
    %v1760 = vmul.f32 %v1696, 0.01
    %v1761 = vmul.f32 %v1697, 0.01
    %v1762 = vmul.f32 %v1698, 0.01
    %v1763 = vmul.f32 %v1699, 0.01
    %v1764 = vmul.f32 %v1700, 0.01
    %v1765 = vmul.f32 %v1701, 0.01
    %v1766 = vmul.f32 %v1702, 0.01
    %v1767 = vmul.f32 %v1703, 0.01
    %v1768 = vmul.f32 %v1704, 0.01
    %v1769 = vmul.f32 %v1705, 0.01
    %v1770 = vsel %vm1706, %v1674, %v1738
    %v1771 = vsel %vm1707, %v1675, %v1739
    %v1772 = vsel %vm1708, %v1676, %v1740
    %v1773 = vsel %vm1709, %v1677, %v1741
    %v1774 = vsel %vm1710, %v1678, %v1742
    %v1775 = vsel %vm1711, %v1679, %v1743
    %v1776 = vsel %vm1712, %v1680, %v1744
    %v1777 = vsel %vm1713, %v1681, %v1745
    %v1778 = vsel %vm1714, %v1682, %v1746
    %v1779 = vsel %vm1715, %v1683, %v1747
    %v1780 = vsel %vm1716, %v1684, %v1748
    %v1781 = vsel %vm1717, %v1685, %v1749
    %v1782 = vsel %vm1718, %v1686, %v1750
    %v1783 = vsel %vm1719, %v1687, %v1751
    %v1784 = vsel %vm1720, %v1688, %v1752
    %v1785 = vsel %vm1721, %v1689, %v1753
    %v1786 = vsel %vm1722, %v1690, %v1754
    %v1787 = vsel %vm1723, %v1691, %v1755
    %v1788 = vsel %vm1724, %v1692, %v1756
    %v1789 = vsel %vm1725, %v1693, %v1757
    %v1790 = vsel %vm1726, %v1694, %v1758
    %v1791 = vsel %vm1727, %v1695, %v1759
    %v1792 = vsel %vm1728, %v1696, %v1760
    %v1793 = vsel %vm1729, %v1697, %v1761
    %v1794 = vsel %vm1730, %v1698, %v1762
    %v1795 = vsel %vm1731, %v1699, %v1763
    %v1796 = vsel %vm1732, %v1700, %v1764
    %v1797 = vsel %vm1733, %v1701, %v1765
    %v1798 = vsel %vm1734, %v1702, %v1766
    %v1799 = vsel %vm1735, %v1703, %v1767
    %v1800 = vsel %vm1736, %v1704, %v1768
    %v1801 = vsel %vm1737, %v1705, %v1769
    %v1802 = vpack.c.bf16 %v1772, %v1770
    %v1803 = vpack.c.bf16 %v1773, %v1771
    %v1804 = vpack.c.bf16 %v1776, %v1774
    %v1805 = vpack.c.bf16 %v1777, %v1775
    %v1806 = vpack.c.bf16 %v1780, %v1778
    %v1807 = vpack.c.bf16 %v1781, %v1779
    %v1808 = vpack.c.bf16 %v1784, %v1782
    %v1809 = vpack.c.bf16 %v1785, %v1783
    %v1810 = vpack.c.bf16 %v1788, %v1786
    %v1811 = vpack.c.bf16 %v1789, %v1787
    %v1812 = vpack.c.bf16 %v1792, %v1790
    %v1813 = vpack.c.bf16 %v1793, %v1791
    %v1814 = vpack.c.bf16 %v1796, %v1794
    %v1815 = vpack.c.bf16 %v1797, %v1795
    %v1816 = vpack.c.bf16 %v1800, %v1798
    %v1817 = vpack.c.bf16 %v1801, %v1799
    %v1818 = vld [vmem:[%s5] sm:$0xff]
    %v1819 = vld [vmem:[%s5 + $0x8] sm:$0xff]
    %v1820 = vld [vmem:[%s5 + $0x10] sm:$0xff]
    %v1821 = vld [vmem:[%s5 + $0x18] sm:$0xff]
    %v1822 = vld [vmem:[%s5 + $0x20] sm:$0xff]
    %v1823 = vld [vmem:[%s5 + $0x28] sm:$0xff]
    %v1824 = vld [vmem:[%s5 + $0x30] sm:$0xff]
    %v1825 = vld [vmem:[%s5 + $0x38] sm:$0xff]
    %v1826 = vld [vmem:[%s5 + $0x40] sm:$0xff]
    %v1827 = vld [vmem:[%s5 + $0x48] sm:$0xff]
    %v1828 = vld [vmem:[%s5 + $0x50] sm:$0xff]
    %v1829 = vld [vmem:[%s5 + $0x58] sm:$0xff]
    %v1830 = vld [vmem:[%s5 + $0x60] sm:$0xff]
    %v1831 = vld [vmem:[%s5 + $0x68] sm:$0xff]
    %v1832 = vld [vmem:[%s5 + $0x70] sm:$0xff]
    %v1833 = vld [vmem:[%s5 + $0x78] sm:$0xff]
    %v1834 = vld [vmem:[%s5 + $0x80] sm:$0xff]
    %v1835 = vld [vmem:[%s5 + $0x88] sm:$0xff]
    %v1836 = vld [vmem:[%s5 + $0x90] sm:$0xff]
    %v1837 = vld [vmem:[%s5 + $0x98] sm:$0xff]
    %v1838 = vld [vmem:[%s5 + $0xa0] sm:$0xff]
    %v1839 = vld [vmem:[%s5 + $0xa8] sm:$0xff]
    %v1840 = vld [vmem:[%s5 + $0xb0] sm:$0xff]
    %v1841 = vld [vmem:[%s5 + $0xb8] sm:$0xff]
    %v1842 = vld [vmem:[%s5 + $0xc0] sm:$0xff]
    %v1843 = vld [vmem:[%s5 + $0xc8] sm:$0xff]
    %v1844 = vld [vmem:[%s5 + $0xd0] sm:$0xff]
    %v1845 = vld [vmem:[%s5 + $0xd8] sm:$0xff]
    %v1846 = vld [vmem:[%s5 + $0xe0] sm:$0xff]
    %v1847 = vld [vmem:[%s5 + $0xe8] sm:$0xff]
    %v1848 = vld [vmem:[%s5 + $0xf0] sm:$0xff]
    %v1849 = vld [vmem:[%s5 + $0xf8] sm:$0xff]
    %v1851 = vlaneseq
    %v1852 = vshrl.u32 %v1851, 7
    %v1853 = vsub.s32 0, %v1852
    %v1854 = vrot.slane %v54, %v1853
    %v1855 = vlaneseq
    %v1856 = vshrl.u32 %v1855, 7
    %v1857 = vsub.s32 1, %v1856
    %v1858 = vrot.slane %v54, %v1857
    %v1893 = vunpack.c.l.b16 %v1818
    %v1894 = vunpack.c.h.b16 %v1818
    %v1895 = vunpack.c.l.b16 %v1819
    %v1896 = vunpack.c.h.b16 %v1819
    %v1897 = vunpack.c.l.b16 %v1820
    %v1898 = vunpack.c.h.b16 %v1820
    %v1899 = vunpack.c.l.b16 %v1821
    %v1900 = vunpack.c.h.b16 %v1821
    %v1901 = vunpack.c.l.b16 %v1822
    %v1902 = vunpack.c.h.b16 %v1822
    %v1903 = vunpack.c.l.b16 %v1823
    %v1904 = vunpack.c.h.b16 %v1823
    %v1905 = vunpack.c.l.b16 %v1824
    %v1906 = vunpack.c.h.b16 %v1824
    %v1907 = vunpack.c.l.b16 %v1825
    %v1908 = vunpack.c.h.b16 %v1825
    %v1909 = vunpack.c.l.b16 %v1826
    %v1910 = vunpack.c.h.b16 %v1826
    %v1911 = vunpack.c.l.b16 %v1827
    %v1912 = vunpack.c.h.b16 %v1827
    %v1913 = vunpack.c.l.b16 %v1828
    %v1914 = vunpack.c.h.b16 %v1828
    %v1915 = vunpack.c.l.b16 %v1829
    %v1916 = vunpack.c.h.b16 %v1829
    %v1917 = vunpack.c.l.b16 %v1830
    %v1918 = vunpack.c.h.b16 %v1830
    %v1919 = vunpack.c.l.b16 %v1831
    %v1920 = vunpack.c.h.b16 %v1831
    %v1921 = vunpack.c.l.b16 %v1832
    %v1922 = vunpack.c.h.b16 %v1832
    %v1923 = vunpack.c.l.b16 %v1833
    %v1924 = vunpack.c.h.b16 %v1833
    %v1925 = vunpack.c.l.b16 %v1834
    %v1926 = vunpack.c.h.b16 %v1834
    %v1927 = vunpack.c.l.b16 %v1835
    %v1928 = vunpack.c.h.b16 %v1835
    %v1929 = vunpack.c.l.b16 %v1836
    %v1930 = vunpack.c.h.b16 %v1836
    %v1931 = vunpack.c.l.b16 %v1837
    %v1932 = vunpack.c.h.b16 %v1837
    %v1933 = vunpack.c.l.b16 %v1838
    %v1934 = vunpack.c.h.b16 %v1838
    %v1935 = vunpack.c.l.b16 %v1839
    %v1936 = vunpack.c.h.b16 %v1839
    %v1937 = vunpack.c.l.b16 %v1840
    %v1938 = vunpack.c.h.b16 %v1840
    %v1939 = vunpack.c.l.b16 %v1841
    %v1940 = vunpack.c.h.b16 %v1841
    %v1941 = vunpack.c.l.b16 %v1842
    %v1942 = vunpack.c.h.b16 %v1842
    %v1943 = vunpack.c.l.b16 %v1843
    %v1944 = vunpack.c.h.b16 %v1843
    %v1945 = vunpack.c.l.b16 %v1844
    %v1946 = vunpack.c.h.b16 %v1844
    %v1947 = vunpack.c.l.b16 %v1845
    %v1948 = vunpack.c.h.b16 %v1845
    %v1949 = vunpack.c.l.b16 %v1846
    %v1950 = vunpack.c.h.b16 %v1846
    %v1951 = vunpack.c.l.b16 %v1847
    %v1952 = vunpack.c.h.b16 %v1847
    %v1953 = vunpack.c.l.b16 %v1848
    %v1954 = vunpack.c.h.b16 %v1848
    %v1955 = vunpack.c.l.b16 %v1849
    %v1956 = vunpack.c.h.b16 %v1849
    %v1957 = vpack.c.b16 %v1895, %v1893
    %v1958 = vpack.c.b16 %v1896, %v1894
    %v1959 = vpack.c.b16 %v1899, %v1897
    %v1960 = vpack.c.b16 %v1900, %v1898
    %v1961 = vpack.c.b16 %v1903, %v1901
    %v1962 = vpack.c.b16 %v1904, %v1902
    %v1963 = vpack.c.b16 %v1907, %v1905
    %v1964 = vpack.c.b16 %v1908, %v1906
    %v1965 = vpack.c.b16 %v1911, %v1909
    %v1966 = vpack.c.b16 %v1912, %v1910
    %v1967 = vpack.c.b16 %v1915, %v1913
    %v1968 = vpack.c.b16 %v1916, %v1914
    %v1969 = vpack.c.b16 %v1919, %v1917
    %v1970 = vpack.c.b16 %v1920, %v1918
    %v1971 = vpack.c.b16 %v1923, %v1921
    %v1972 = vpack.c.b16 %v1924, %v1922
    %v1973 = vpack.c.b16 %v1927, %v1925
    %v1974 = vpack.c.b16 %v1928, %v1926
    %v1975 = vpack.c.b16 %v1931, %v1929
    %v1976 = vpack.c.b16 %v1932, %v1930
    %v1977 = vpack.c.b16 %v1935, %v1933
    %v1978 = vpack.c.b16 %v1936, %v1934
    %v1979 = vpack.c.b16 %v1939, %v1937
    %v1980 = vpack.c.b16 %v1940, %v1938
    %v1981 = vpack.c.b16 %v1943, %v1941
    %v1982 = vpack.c.b16 %v1944, %v1942
    %v1983 = vpack.c.b16 %v1947, %v1945
    %v1984 = vpack.c.b16 %v1948, %v1946
    %v1985 = vpack.c.b16 %v1951, %v1949
    %v1986 = vpack.c.b16 %v1952, %v1950
    %v1987 = vpack.c.b16 %v1955, %v1953
    %v1988 = vpack.c.b16 %v1956, %v1954
    %2021 = vmatprep.subr.bf16.mxu0 %v1972
    %2022 = vmatpush1.bf16.msra.mxu0 %v1971
    %2023 = vmatprep.subr.bf16.mxu0 %v1970
    %2024 = vmatpush1.bf16.msra.mxu0 %v1969
    %2025 = vmatprep.subr.bf16.mxu0 %v1968
    %2026 = vmatpush1.bf16.msra.mxu0 %v1967
    %2027 = vmatprep.subr.bf16.mxu0 %v1966
    %2028 = vmatpush1.bf16.msra.mxu0 %v1965
    %2029 = vmatprep.subr.bf16.mxu0 %v1964
    %2030 = vmatpush1.bf16.msra.mxu0 %v1963
    %2031 = vmatprep.subr.bf16.mxu0 %v1962
    %2032 = vmatpush1.bf16.msra.mxu0 %v1961
    %2033 = vmatprep.subr.bf16.mxu0 %v1960
    %2034 = vmatpush1.bf16.msra.mxu0 %v1959
    %2035 = vmatprep.subr.bf16.mxu0 %v1958
    %2036 = vmatpush1.bf16.msra.mxu0 %v1957
    %2037 = vmatprep.subr.bf16.mxu0 %v1988
    %2038 = vmatpush2.bf16.msra.mxu0 %v1987
    %2039 = vmatprep.subr.bf16.mxu0 %v1986
    %2040 = vmatpush2.bf16.msra.mxu0 %v1985
    %2041 = vmatprep.subr.bf16.mxu0 %v1984
    %2042 = vmatpush2.bf16.msra.mxu0 %v1983
    %2043 = vmatprep.subr.bf16.mxu0 %v1982
    %2044 = vmatpush2.bf16.msra.mxu0 %v1981
    %2045 = vmatprep.subr.bf16.mxu0 %v1980
    %2046 = vmatpush2.bf16.msra.mxu0 %v1979
    %2047 = vmatprep.subr.bf16.mxu0 %v1978
    %2048 = vmatpush2.bf16.msra.mxu0 %v1977
    %2049 = vmatprep.subr.bf16.mxu0 %v1976
    %2050 = vmatpush2.bf16.msra.mxu0 %v1975
    %2051 = vmatprep.subr.bf16.mxu0 %v1974
    %2052 = vmatpush2.bf16.msra.mxu0 %v1973
    %2053 = vmatprep.mubr.bf16.mxu0 %v1803
    %2054 = vmatmul.mubr.bf16.gmra.mxu0 %v1802
    %v2055 = vpop.f32.mrf.mxu0
    %v2056 = vadd.f32 %v1854, %v2055
    %v2057 = vpop.f32.mrf.mxu0
    %v2058 = vadd.f32 %v1858, %v2057
    %v2059 = vpop.f32.mrf.mxu0
    %v2060 = vadd.f32 %v1854, %v2059
    %v2061 = vpop.f32.mrf.mxu0
    %v2062 = vadd.f32 %v1858, %v2061
    %2063 = vmatprep.mubr.bf16.mxu0 %v1805
    %2064 = vmatmul.mubr.bf16.gmra.mxu0 %v1804
    %v2065 = vpop.f32.mrf.mxu0
    %v2066 = vadd.f32 %v1854, %v2065
    %v2067 = vpop.f32.mrf.mxu0
    %v2068 = vadd.f32 %v1858, %v2067
    %v2069 = vpop.f32.mrf.mxu0
    %v2070 = vadd.f32 %v1854, %v2069
    %v2071 = vpop.f32.mrf.mxu0
    %v2072 = vadd.f32 %v1858, %v2071
    %2073 = vmatprep.mubr.bf16.mxu0 %v1807
    %2074 = vmatmul.mubr.bf16.gmra.mxu0 %v1806
    %v2075 = vpop.f32.mrf.mxu0
    %v2076 = vadd.f32 %v1854, %v2075
    %v2077 = vpop.f32.mrf.mxu0
    %v2078 = vadd.f32 %v1858, %v2077
    %v2079 = vpop.f32.mrf.mxu0
    %v2080 = vadd.f32 %v1854, %v2079
    %v2081 = vpop.f32.mrf.mxu0
    %v2082 = vadd.f32 %v1858, %v2081
    %2083 = vmatprep.mubr.bf16.mxu0 %v1809
    %2084 = vmatmul.mubr.bf16.gmra.mxu0 %v1808
    %v2085 = vpop.f32.mrf.mxu0
    %v2086 = vadd.f32 %v1854, %v2085
    %v2087 = vpop.f32.mrf.mxu0
    %v2088 = vadd.f32 %v1858, %v2087
    %v2089 = vpop.f32.mrf.mxu0
    %v2090 = vadd.f32 %v1854, %v2089
    %v2091 = vpop.f32.mrf.mxu0
    %v2092 = vadd.f32 %v1858, %v2091
    %2093 = vmatprep.mubr.bf16.mxu0 %v1811
    %2094 = vmatmul.mubr.bf16.gmra.mxu0 %v1810
    %v2095 = vpop.f32.mrf.mxu0
    %v2096 = vadd.f32 %v1854, %v2095
    %v2097 = vpop.f32.mrf.mxu0
    %v2098 = vadd.f32 %v1858, %v2097
    %v2099 = vpop.f32.mrf.mxu0
    %v2100 = vadd.f32 %v1854, %v2099
    %v2101 = vpop.f32.mrf.mxu0
    %v2102 = vadd.f32 %v1858, %v2101
    %2103 = vmatprep.mubr.bf16.mxu0 %v1813
    %2104 = vmatmul.mubr.bf16.gmra.mxu0 %v1812
    %v2105 = vpop.f32.mrf.mxu0
    %v2106 = vadd.f32 %v1854, %v2105
    %v2107 = vpop.f32.mrf.mxu0
    %v2108 = vadd.f32 %v1858, %v2107
    %v2109 = vpop.f32.mrf.mxu0
    %v2110 = vadd.f32 %v1854, %v2109
    %v2111 = vpop.f32.mrf.mxu0
    %v2112 = vadd.f32 %v1858, %v2111
    %2113 = vmatprep.mubr.bf16.mxu0 %v1815
    %2114 = vmatmul.mubr.bf16.gmra.mxu0 %v1814
    %v2115 = vpop.f32.mrf.mxu0
    %v2116 = vadd.f32 %v1854, %v2115
    %v2117 = vpop.f32.mrf.mxu0
    %v2118 = vadd.f32 %v1858, %v2117
    %v2119 = vpop.f32.mrf.mxu0
    %v2120 = vadd.f32 %v1854, %v2119
    %v2121 = vpop.f32.mrf.mxu0
    %v2122 = vadd.f32 %v1858, %v2121
    %2123 = vmatprep.mubr.bf16.mxu0 %v1817
    %2124 = vmatmul.mubr.bf16.gmra.mxu0 %v1816
    %v2125 = vpop.f32.mrf.mxu0
    %v2126 = vadd.f32 %v1854, %v2125
    %v2127 = vpop.f32.mrf.mxu0
    %v2128 = vadd.f32 %v1858, %v2127
    %v2129 = vpop.f32.mrf.mxu0
    %v2130 = vadd.f32 %v1854, %v2129
    %v2131 = vpop.f32.mrf.mxu0
    %v2132 = vadd.f32 %v1858, %v2131
    %2133 = vdwg.mxu0
    %2134 = vst [vmem:[#allocation5] sm:$0xff] %v2056
    %2135 = vst [vmem:[#allocation5 + $0x8] sm:$0xff] %v2058
    %2136 = vst [vmem:[#allocation5 + $0x10] sm:$0xff] %v2060
    %2137 = vst [vmem:[#allocation5 + $0x18] sm:$0xff] %v2062
    %2138 = vst [vmem:[#allocation5 + $0x20] sm:$0xff] %v2066
    %2139 = vst [vmem:[#allocation5 + $0x28] sm:$0xff] %v2068
    %2140 = vst [vmem:[#allocation5 + $0x30] sm:$0xff] %v2070
    %2141 = vst [vmem:[#allocation5 + $0x38] sm:$0xff] %v2072
    %2142 = vst [vmem:[#allocation5 + $0x40] sm:$0xff] %v2076
    %2143 = vst [vmem:[#allocation5 + $0x48] sm:$0xff] %v2078
    %2144 = vst [vmem:[#allocation5 + $0x50] sm:$0xff] %v2080
    %2145 = vst [vmem:[#allocation5 + $0x58] sm:$0xff] %v2082
    %2146 = vst [vmem:[#allocation5 + $0x60] sm:$0xff] %v2086
    %2147 = vst [vmem:[#allocation5 + $0x68] sm:$0xff] %v2088
    %2148 = vst [vmem:[#allocation5 + $0x70] sm:$0xff] %v2090
    %2149 = vst [vmem:[#allocation5 + $0x78] sm:$0xff] %v2092
    %2150 = vst [vmem:[#allocation5 + $0x80] sm:$0xff] %v2096
    %2151 = vst [vmem:[#allocation5 + $0x88] sm:$0xff] %v2098
    %2152 = vst [vmem:[#allocation5 + $0x90] sm:$0xff] %v2100
    %2153 = vst [vmem:[#allocation5 + $0x98] sm:$0xff] %v2102
    %2154 = vst [vmem:[#allocation5 + $0xa0] sm:$0xff] %v2106
    %2155 = vst [vmem:[#allocation5 + $0xa8] sm:$0xff] %v2108
    %2156 = vst [vmem:[#allocation5 + $0xb0] sm:$0xff] %v2110
    %2157 = vst [vmem:[#allocation5 + $0xb8] sm:$0xff] %v2112
    %2158 = vst [vmem:[#allocation5 + $0xc0] sm:$0xff] %v2116
    %2159 = vst [vmem:[#allocation5 + $0xc8] sm:$0xff] %v2118
    %2160 = vst [vmem:[#allocation5 + $0xd0] sm:$0xff] %v2120
    %2161 = vst [vmem:[#allocation5 + $0xd8] sm:$0xff] %v2122
    %2162 = vst [vmem:[#allocation5 + $0xe0] sm:$0xff] %v2126
    %2163 = vst [vmem:[#allocation5 + $0xe8] sm:$0xff] %v2128
    %2164 = vst [vmem:[#allocation5 + $0xf0] sm:$0xff] %v2130
    %2165 = vst [vmem:[#allocation5 + $0xf8] sm:$0xff] %v2132
    %2166 = vst [vmem:[%s8] sm:$0xff] %v1061
    %2167 = vst [vmem:[%s8 + $0x8] sm:$0xff] %v1063
    %2168 = vst [vmem:[%s8 + $0x10] sm:$0xff] %v1065
    %2169 = vst [vmem:[%s8 + $0x18] sm:$0xff] %v1067
    %2170 = vst [vmem:[%s8 + $0x20] sm:$0xff] %v1071
    %2171 = vst [vmem:[%s8 + $0x28] sm:$0xff] %v1073
    %2172 = vst [vmem:[%s8 + $0x30] sm:$0xff] %v1075
    %2173 = vst [vmem:[%s8 + $0x38] sm:$0xff] %v1077
    %2174 = vst [vmem:[%s8 + $0x40] sm:$0xff] %v1081
    %2175 = vst [vmem:[%s8 + $0x48] sm:$0xff] %v1083
    %2176 = vst [vmem:[%s8 + $0x50] sm:$0xff] %v1085
    %2177 = vst [vmem:[%s8 + $0x58] sm:$0xff] %v1087
    %2178 = vst [vmem:[%s8 + $0x60] sm:$0xff] %v1091
    %2179 = vst [vmem:[%s8 + $0x68] sm:$0xff] %v1093
    %2180 = vst [vmem:[%s8 + $0x70] sm:$0xff] %v1095
    %2181 = vst [vmem:[%s8 + $0x78] sm:$0xff] %v1097
    %2182 = vst [vmem:[%s8 + $0x80] sm:$0xff] %v1101
    %2183 = vst [vmem:[%s8 + $0x88] sm:$0xff] %v1103
    %2184 = vst [vmem:[%s8 + $0x90] sm:$0xff] %v1105
    %2185 = vst [vmem:[%s8 + $0x98] sm:$0xff] %v1107
    %2186 = vst [vmem:[%s8 + $0xa0] sm:$0xff] %v1111
    %2187 = vst [vmem:[%s8 + $0xa8] sm:$0xff] %v1113
    %2188 = vst [vmem:[%s8 + $0xb0] sm:$0xff] %v1115
    %2189 = vst [vmem:[%s8 + $0xb8] sm:$0xff] %v1117
    %2190 = vst [vmem:[%s8 + $0xc0] sm:$0xff] %v1121
    %2191 = vst [vmem:[%s8 + $0xc8] sm:$0xff] %v1123
    %2192 = vst [vmem:[%s8 + $0xd0] sm:$0xff] %v1125
    %2193 = vst [vmem:[%s8 + $0xd8] sm:$0xff] %v1127
    %2194 = vst [vmem:[%s8 + $0xe0] sm:$0xff] %v1131
    %2195 = vst [vmem:[%s8 + $0xe8] sm:$0xff] %v1133
    %2196 = vst [vmem:[%s8 + $0xf0] sm:$0xff] %v1135
    %2197 = vst [vmem:[%s8 + $0xf8] sm:$0xff] %v1137
    // Predicated region
    $region34: #{beta_vae_forward.1} parent=1 // pred_check
      _
    $region35: #{beta_vae_forward.1} parent=1 // pred_check_branch
      %2199 = sbr.rel (0) target = $region37
    $region36: #{beta_vae_forward.1} parent=1 // pred_region
      %s2201 = ssub.s32 4096, 4096
      %2202 = vsyncadd [#allocation4], %s2201
      %s2203 = sshll.u32 [#allocation5], 4
      %s2204 = int_to_ptr.vmem [resolvable:$true] %s2203
      %2209 = dma.vmem_to_hbm [thread:$0]  %s2204, 4096, %s7, [#allocation4], 256, 256, 16
    $region37: #{beta_vae_forward.1} parent=1 // pred_fallthru
      _
    // Predicated region
    $region38: #{beta_vae_forward.1} parent=1 // pred_check
      _
    $region39: #{beta_vae_forward.1} parent=1 // pred_check_branch
      %2211 = sbr.rel (0) target = $region41
    $region40: #{beta_vae_forward.1} parent=1 // pred_region
      _
    $region41: #{beta_vae_forward.1} parent=1 // pred_fallthru
      _
    // Predicated region
    $region42: #{beta_vae_forward.1} parent=1 // pred_check
      _
    $region43: #{beta_vae_forward.1} parent=1 // pred_check_branch
      %2213 = sbr.rel (0) target = $region45
    $region44: #{beta_vae_forward.1} parent=1 // pred_region
      %2214 = dma.done [#allocation4], 4096
    $region45: #{beta_vae_forward.1} parent=1 // pred_fallthru
      _
    // Predicated region
    $region46: #{beta_vae_forward.1} parent=1 // pred_check
      _
    $region47: #{beta_vae_forward.1} parent=1 // pred_check_branch
      %2216 = sbr.rel (0) target = $region49
    $region48: #{beta_vae_forward.1} parent=1 // pred_region
      _
    $region49: #{beta_vae_forward.1} parent=1 // pred_fallthru
      _
    %2217 = vsyncpa [#allocation3], 1
    %2218 = vsyncpa [#allocation4], 1

</llo_original>
